<compile_context>
chip_gen: v5e
topology: v5e:2x2
jax: 0.10.0
libtpu: 0.0.40
codegen_flags: <defaults>
</compile_context>

<pallas_src>
import jax
import jax.numpy as jnp
from jax.experimental import pallas as pl
from jax.experimental.pallas import tpu as pltpu

C1 = 0.01 ** 2
C2 = 0.03 ** 2


def _ssim_kernel(x_ref, y_ref, out_ref, xp_ref, yp_ref, xx_ref, yy_ref, xy_ref):
    # x_ref / y_ref / out_ref: (G, H, W) blocks of stacked channel slabs.
    # *_p refs: (G, H+2, W+2) f32 VMEM scratch for the reflection-padded slabs.
    G, H, W = x_ref.shape

    x = x_ref[...].astype(jnp.float32)
    y = y_ref[...].astype(jnp.float32)

    def write_padded(dst_ref, a):
        # ReflectionPad2d(1). Columns are mirrored in-register (two 1-lane
        # slices + concat) so every store below spans the scratch's full lane
        # extent; rows are plain sublane-offset stores.
        ap = jnp.concatenate([a[:, :, 1:2], a, a[:, :, W - 2:W - 1]], axis=2)
        dst_ref[:, 1:H + 1, :] = ap
        dst_ref[:, 0:1, :] = ap[:, 1:2, :]
        dst_ref[:, H + 1:H + 2, :] = ap[:, H - 2:H - 1, :]

    # Reflection padding commutes with elementwise products, so the product
    # slabs are built from the unpadded values (no padded reload needed).
    write_padded(xp_ref, x)
    write_padded(yp_ref, y)
    write_padded(xx_ref, x * x)
    write_padded(yy_ref, y * y)
    write_padded(xy_ref, x * y)

    def box_sum(p_ref):
        # Separable 3x3 *sum* (the 1/9 is folded into the constants below).
        # Row taps are shifted ref-slice loads (ride the vld slots, not VALU).
        rows = p_ref[:, 0:H, :] + p_ref[:, 1:H + 1, :] + p_ref[:, 2:H + 2, :]
        # TODO(synk): for W >= 256 offload this lane-dim 3-tap sum to the idle
        # MXU via a static banded (W+2, W) matmul.
        return rows[:, :, 0:W] + rows[:, :, 1:W + 1] + rows[:, :, 2:W + 2]

    sx = box_sum(xp_ref)
    sy = box_sum(yp_ref)
    sxx = box_sum(xx_ref)
    syy = box_sum(yy_ref)
    sxy = box_sum(xy_ref)

    # SSIM on raw 3x3 sums: mu = S/9 and the 1/81^2 factors cancel in the
    # ratio, so absorb them into the constants (81*C1, 81*C2).
    c1 = 81.0 * C1
    c2 = 81.0 * C2
    sxsy = sx * sy
    ss = sx * sx + sy * sy
    ssim_n = (2.0 * sxsy + c1) * (18.0 * sxy - 2.0 * sxsy + c2)
    ssim_d = (ss + c1) * (9.0 * (sxx + syy) - ss + c2)

    # EUP approximate reciprocal + one Newton-Raphson step: divide stays off
    # the VALU, but accuracy is back at ~f32 (the raw approx error was the
    # cause of the previous correctness failure).
    inv_d = pl.reciprocal(ssim_d, approx=True)
    inv_d = inv_d * (2.0 - ssim_d * inv_d)

    out = jnp.clip((1.0 - ssim_n * inv_d) * 0.5, 0.0, 1.0)
    out_ref[...] = out.astype(out_ref.dtype)


def ssim(x, y, *, vmem_budget_bytes=24 << 20):
    """SSIM loss map, equivalent to the PyTorch SSIM module's forward.

    x, y: (B, C, H, W) arrays (f32 or bf16 I/O; compute is f32 inside).
    Returns (B, C, H, W) in the input dtype.
    """
    assert x.shape == y.shape
    B, C, H, W = x.shape
    assert H >= 2 and W >= 2, "ReflectionPad2d(1) needs spatial dims >= 2"
    out_dtype = x.dtype

    # SSIM is symmetric under an H<->W transpose (3x3 box filter + reflection
    # pad both commute with it), so put the larger spatial extent on the lane
    # axis for denser vregs / unmasked stores. Pure layout plumbing.
    transposed = H > W
    if transposed:
        x = jnp.swapaxes(x, 2, 3)
        y = jnp.swapaxes(y, 2, 3)
        H, W = W, H

    # Fuse (B, C) into a single axis and process G slabs per grid step.
    N = B * C
    x2 = x.reshape(N, H, W)
    y2 = y.reshape(N, H, W)

    in_item = jnp.dtype(x.dtype).itemsize
    out_item = jnp.dtype(out_dtype).itemsize

    def step_bytes(g):
        io = 2 * (2 * g * H * W * in_item) + 2 * g * H * W * out_item  # double-buffered blocks
        scratch = 5 * g * (H + 2) * (W + 2) * 4                        # padded f32 scratch slabs
        temps = 8 * g * H * W * 4                                      # live temporaries / spill slack
        return io + scratch + temps

    # Largest divisor of N whose per-step live set fits the budget (sized so it
    # also fits v7x's smaller 64 MiB physical VMEM).
    G = 1
    for g in range(1, N + 1):
        if N % g == 0 and step_bytes(g) <= vmem_budget_bytes:
            G = g
    # TODO(synk): for single slabs too large for the budget (very high-res
    # images, esp. on v7x), add an H-row grid axis with a 2-row halo instead of
    # shrinking W.

    vmem_limit = int(min(max(step_bytes(G) + (8 << 20), 32 << 20), 48 << 20))

    spec = pl.BlockSpec((G, H, W), lambda n: (n, 0, 0))

    out = pl.pallas_call(
        _ssim_kernel,
        out_shape=jax.ShapeDtypeStruct((N, H, W), out_dtype),
        grid=(N // G,),
        in_specs=[spec, spec],
        out_specs=spec,
        scratch_shapes=[pltpu.VMEM((G, H + 2, W + 2), jnp.float32)] * 5,
        compiler_params=pltpu.CompilerParams(
            dimension_semantics=("parallel",),
            vmem_limit_bytes=vmem_limit),
    )(x2, y2)

    out = out.reshape(B, C, H, W)
    if transposed:
        out = jnp.swapaxes(out, 2, 3)
    return out


def _ssim_ref(x, y):
    """Pure-JAX reference matching the PyTorch module semantics."""
    pad = ((0, 0), (0, 0), (1, 1), (1, 1))
    xp = jnp.pad(x, pad, mode="reflect")
    yp = jnp.pad(y, pad, mode="reflect")
    H, W = x.shape[2], x.shape[3]

    def pool3(a):
        acc = jnp.zeros_like(a[:, :, :H, :W])
        for di in range(3):
            for dj in range(3):
                acc = acc + a[:, :, di:di + H, dj:dj + W]
        return acc / 9.0

    mu_x = pool3(xp)
    mu_y = pool3(yp)
    sigma_x = pool3(xp * xp) - mu_x ** 2
    sigma_y = pool3(yp * yp) - mu_y ** 2
    sigma_xy = pool3(xp * yp) - mu_x * mu_y
    n = (2 * mu_x * mu_y + C1) * (2 * sigma_xy + C2)
    d = (mu_x ** 2 + mu_y ** 2 + C1) * (sigma_x + sigma_y + C2)
    return jnp.clip((1.0 - n / d) / 2.0, 0.0, 1.0)


if __name__ == "__main__":
    key = jax.random.PRNGKey(0)
    kx, ky = jax.random.split(key)
    B, C, H, W = 2, 4, 16, 16
    x = jax.random.uniform(kx, (B, C, H, W), dtype=jnp.float32)
    y = jax.random.uniform(ky, (B, C, H, W), dtype=jnp.float32)

    out = ssim(x, y)
    jax.block_until_ready(out)

    ref = _ssim_ref(x, y)
    assert out.shape == (B, C, H, W)
    # NR-refined reciprocal + folded constants keep the kernel within f32
    # rounding of the exact-divide reference.
    assert jnp.allclose(out, ref, atol=1e-4, rtol=1e-4), \
        float(jnp.max(jnp.abs(out - ref)))

    print("KERNEL_OK")
</pallas_src>

<mosaic_0001>
module attributes {stable_mosaic.version = 11 : i64} {
  func.func @_ssim_kernel(%arg0: i32, %arg1: memref<8x16x16xf32, #tpu.memory_space<vmem>>, %arg2: memref<8x16x16xf32, #tpu.memory_space<vmem>>, %arg3: memref<8x16x16xf32, #tpu.memory_space<vmem>>, %arg4: memref<8x18x18xf32, #tpu.memory_space<vmem>>, %arg5: memref<8x18x18xf32, #tpu.memory_space<vmem>>, %arg6: memref<8x18x18xf32, #tpu.memory_space<vmem>>, %arg7: memref<8x18x18xf32, #tpu.memory_space<vmem>>, %arg8: memref<8x18x18xf32, #tpu.memory_space<vmem>>) attributes {dimension_semantics = [#tpu.dimension_semantics<parallel>], iteration_bounds = array<i64: 1>, scalar_prefetch = 0 : i64, scratch_operands = 5 : i64, tpu.core_type = #tpu.core_type<tc>, window_params = [{transform_indices = @transform_0, window_bounds = array<i64: 8, 16, 16>}, {transform_indices = @transform_1, window_bounds = array<i64: 8, 16, 16>}, {transform_indices = @transform_2, window_bounds = array<i64: 8, 16, 16>}]} {
    %c0 = arith.constant 0 : index
    %c0_0 = arith.constant 0 : index
    %c0_1 = arith.constant 0 : index
    %0 = vector.load %arg1[%c0, %c0_0, %c0_1] : memref<8x16x16xf32, #tpu.memory_space<vmem>>, vector<8x16x16xf32>
    %c0_2 = arith.constant 0 : index
    %c0_3 = arith.constant 0 : index
    %c0_4 = arith.constant 0 : index
    %1 = vector.load %arg2[%c0_2, %c0_3, %c0_4] : memref<8x16x16xf32, #tpu.memory_space<vmem>>, vector<8x16x16xf32>
    %2 = vector.extract_strided_slice %0 {offsets = [0, 0, 1], sizes = [8, 16, 1], strides = [1, 1, 1]} : vector<8x16x16xf32> to vector<8x16x1xf32>
    %3 = vector.extract_strided_slice %0 {offsets = [0, 0, 14], sizes = [8, 16, 1], strides = [1, 1, 1]} : vector<8x16x16xf32> to vector<8x16x1xf32>
    %4 = tpu.concatenate %2, %0, %3 in 2 : vector<8x16x1xf32>, vector<8x16x16xf32>, vector<8x16x1xf32> -> vector<8x16x18xf32>
    %c0_5 = arith.constant 0 : index
    %c1 = arith.constant 1 : index
    %c0_6 = arith.constant 0 : index
    %5 = vector.load %arg4[%c0_5, %c1, %c0_6] : memref<8x18x18xf32, #tpu.memory_space<vmem>>, vector<8x16x18xf32>
    tpu.vector_store %arg4[%c0_5, %c1, %c0_6], %4 {strides = array<i32>} : memref<8x18x18xf32, #tpu.memory_space<vmem>>, vector<8x16x18xf32>,
    %6 = vector.extract_strided_slice %4 {offsets = [0, 1, 0], sizes = [8, 1, 18], strides = [1, 1, 1]} : vector<8x16x18xf32> to vector<8x1x18xf32>
    %c0_7 = arith.constant 0 : index
    %c0_8 = arith.constant 0 : index
    %c0_9 = arith.constant 0 : index
    %7 = vector.load %arg4[%c0_7, %c0_8, %c0_9] : memref<8x18x18xf32, #tpu.memory_space<vmem>>, vector<8x1x18xf32>
    tpu.vector_store %arg4[%c0_7, %c0_8, %c0_9], %6 {strides = array<i32>} : memref<8x18x18xf32, #tpu.memory_space<vmem>>, vector<8x1x18xf32>,
    %8 = vector.extract_strided_slice %4 {offsets = [0, 14, 0], sizes = [8, 1, 18], strides = [1, 1, 1]} : vector<8x16x18xf32> to vector<8x1x18xf32>
    %c0_10 = arith.constant 0 : index
    %c17 = arith.constant 17 : index
    %c0_11 = arith.constant 0 : index
    %9 = vector.load %arg4[%c0_10, %c17, %c0_11] : memref<8x18x18xf32, #tpu.memory_space<vmem>>, vector<8x1x18xf32>
    tpu.vector_store %arg4[%c0_10, %c17, %c0_11], %8 {strides = array<i32>} : memref<8x18x18xf32, #tpu.memory_space<vmem>>, vector<8x1x18xf32>,
    %10 = vector.extract_strided_slice %1 {offsets = [0, 0, 1], sizes = [8, 16, 1], strides = [1, 1, 1]} : vector<8x16x16xf32> to vector<8x16x1xf32>
    %11 = vector.extract_strided_slice %1 {offsets = [0, 0, 14], sizes = [8, 16, 1], strides = [1, 1, 1]} : vector<8x16x16xf32> to vector<8x16x1xf32>
    %12 = tpu.concatenate %10, %1, %11 in 2 : vector<8x16x1xf32>, vector<8x16x16xf32>, vector<8x16x1xf32> -> vector<8x16x18xf32>
    %c0_12 = arith.constant 0 : index
    %c1_13 = arith.constant 1 : index
    %c0_14 = arith.constant 0 : index
    %13 = vector.load %arg5[%c0_12, %c1_13, %c0_14] : memref<8x18x18xf32, #tpu.memory_space<vmem>>, vector<8x16x18xf32>
    tpu.vector_store %arg5[%c0_12, %c1_13, %c0_14], %12 {strides = array<i32>} : memref<8x18x18xf32, #tpu.memory_space<vmem>>, vector<8x16x18xf32>,
    %14 = vector.extract_strided_slice %12 {offsets = [0, 1, 0], sizes = [8, 1, 18], strides = [1, 1, 1]} : vector<8x16x18xf32> to vector<8x1x18xf32>
    %c0_15 = arith.constant 0 : index
    %c0_16 = arith.constant 0 : index
    %c0_17 = arith.constant 0 : index
    %15 = vector.load %arg5[%c0_15, %c0_16, %c0_17] : memref<8x18x18xf32, #tpu.memory_space<vmem>>, vector<8x1x18xf32>
    tpu.vector_store %arg5[%c0_15, %c0_16, %c0_17], %14 {strides = array<i32>} : memref<8x18x18xf32, #tpu.memory_space<vmem>>, vector<8x1x18xf32>,
    %16 = vector.extract_strided_slice %12 {offsets = [0, 14, 0], sizes = [8, 1, 18], strides = [1, 1, 1]} : vector<8x16x18xf32> to vector<8x1x18xf32>
    %c0_18 = arith.constant 0 : index
    %c17_19 = arith.constant 17 : index
    %c0_20 = arith.constant 0 : index
    %17 = vector.load %arg5[%c0_18, %c17_19, %c0_20] : memref<8x18x18xf32, #tpu.memory_space<vmem>>, vector<8x1x18xf32>
    tpu.vector_store %arg5[%c0_18, %c17_19, %c0_20], %16 {strides = array<i32>} : memref<8x18x18xf32, #tpu.memory_space<vmem>>, vector<8x1x18xf32>,
    %18 = arith.mulf %0, %0 : vector<8x16x16xf32>
    %19 = vector.extract_strided_slice %18 {offsets = [0, 0, 1], sizes = [8, 16, 1], strides = [1, 1, 1]} : vector<8x16x16xf32> to vector<8x16x1xf32>
    %20 = vector.extract_strided_slice %18 {offsets = [0, 0, 14], sizes = [8, 16, 1], strides = [1, 1, 1]} : vector<8x16x16xf32> to vector<8x16x1xf32>
    %21 = tpu.concatenate %19, %18, %20 in 2 : vector<8x16x1xf32>, vector<8x16x16xf32>, vector<8x16x1xf32> -> vector<8x16x18xf32>
    %c0_21 = arith.constant 0 : index
    %c1_22 = arith.constant 1 : index
    %c0_23 = arith.constant 0 : index
    %22 = vector.load %arg6[%c0_21, %c1_22, %c0_23] : memref<8x18x18xf32, #tpu.memory_space<vmem>>, vector<8x16x18xf32>
    tpu.vector_store %arg6[%c0_21, %c1_22, %c0_23], %21 {strides = array<i32>} : memref<8x18x18xf32, #tpu.memory_space<vmem>>, vector<8x16x18xf32>,
    %23 = vector.extract_strided_slice %21 {offsets = [0, 1, 0], sizes = [8, 1, 18], strides = [1, 1, 1]} : vector<8x16x18xf32> to vector<8x1x18xf32>
    %c0_24 = arith.constant 0 : index
    %c0_25 = arith.constant 0 : index
    %c0_26 = arith.constant 0 : index
    %24 = vector.load %arg6[%c0_24, %c0_25, %c0_26] : memref<8x18x18xf32, #tpu.memory_space<vmem>>, vector<8x1x18xf32>
    tpu.vector_store %arg6[%c0_24, %c0_25, %c0_26], %23 {strides = array<i32>} : memref<8x18x18xf32, #tpu.memory_space<vmem>>, vector<8x1x18xf32>,
    %25 = vector.extract_strided_slice %21 {offsets = [0, 14, 0], sizes = [8, 1, 18], strides = [1, 1, 1]} : vector<8x16x18xf32> to vector<8x1x18xf32>
    %c0_27 = arith.constant 0 : index
    %c17_28 = arith.constant 17 : index
    %c0_29 = arith.constant 0 : index
    %26 = vector.load %arg6[%c0_27, %c17_28, %c0_29] : memref<8x18x18xf32, #tpu.memory_space<vmem>>, vector<8x1x18xf32>
    tpu.vector_store %arg6[%c0_27, %c17_28, %c0_29], %25 {strides = array<i32>} : memref<8x18x18xf32, #tpu.memory_space<vmem>>, vector<8x1x18xf32>,
    %27 = arith.mulf %1, %1 : vector<8x16x16xf32>
    %28 = vector.extract_strided_slice %27 {offsets = [0, 0, 1], sizes = [8, 16, 1], strides = [1, 1, 1]} : vector<8x16x16xf32> to vector<8x16x1xf32>
    %29 = vector.extract_strided_slice %27 {offsets = [0, 0, 14], sizes = [8, 16, 1], strides = [1, 1, 1]} : vector<8x16x16xf32> to vector<8x16x1xf32>
    %30 = tpu.concatenate %28, %27, %29 in 2 : vector<8x16x1xf32>, vector<8x16x16xf32>, vector<8x16x1xf32> -> vector<8x16x18xf32>
    %c0_30 = arith.constant 0 : index
    %c1_31 = arith.constant 1 : index
    %c0_32 = arith.constant 0 : index
    %31 = vector.load %arg7[%c0_30, %c1_31, %c0_32] : memref<8x18x18xf32, #tpu.memory_space<vmem>>, vector<8x16x18xf32>
    tpu.vector_store %arg7[%c0_30, %c1_31, %c0_32], %30 {strides = array<i32>} : memref<8x18x18xf32, #tpu.memory_space<vmem>>, vector<8x16x18xf32>,
    %32 = vector.extract_strided_slice %30 {offsets = [0, 1, 0], sizes = [8, 1, 18], strides = [1, 1, 1]} : vector<8x16x18xf32> to vector<8x1x18xf32>
    %c0_33 = arith.constant 0 : index
    %c0_34 = arith.constant 0 : index
    %c0_35 = arith.constant 0 : index
    %33 = vector.load %arg7[%c0_33, %c0_34, %c0_35] : memref<8x18x18xf32, #tpu.memory_space<vmem>>, vector<8x1x18xf32>
    tpu.vector_store %arg7[%c0_33, %c0_34, %c0_35], %32 {strides = array<i32>} : memref<8x18x18xf32, #tpu.memory_space<vmem>>, vector<8x1x18xf32>,
    %34 = vector.extract_strided_slice %30 {offsets = [0, 14, 0], sizes = [8, 1, 18], strides = [1, 1, 1]} : vector<8x16x18xf32> to vector<8x1x18xf32>
    %c0_36 = arith.constant 0 : index
    %c17_37 = arith.constant 17 : index
    %c0_38 = arith.constant 0 : index
    %35 = vector.load %arg7[%c0_36, %c17_37, %c0_38] : memref<8x18x18xf32, #tpu.memory_space<vmem>>, vector<8x1x18xf32>
    tpu.vector_store %arg7[%c0_36, %c17_37, %c0_38], %34 {strides = array<i32>} : memref<8x18x18xf32, #tpu.memory_space<vmem>>, vector<8x1x18xf32>,
    %36 = arith.mulf %0, %1 : vector<8x16x16xf32>
    %37 = vector.extract_strided_slice %36 {offsets = [0, 0, 1], sizes = [8, 16, 1], strides = [1, 1, 1]} : vector<8x16x16xf32> to vector<8x16x1xf32>
    %38 = vector.extract_strided_slice %36 {offsets = [0, 0, 14], sizes = [8, 16, 1], strides = [1, 1, 1]} : vector<8x16x16xf32> to vector<8x16x1xf32>
    %39 = tpu.concatenate %37, %36, %38 in 2 : vector<8x16x1xf32>, vector<8x16x16xf32>, vector<8x16x1xf32> -> vector<8x16x18xf32>
    %c0_39 = arith.constant 0 : index
    %c1_40 = arith.constant 1 : index
    %c0_41 = arith.constant 0 : index
    %40 = vector.load %arg8[%c0_39, %c1_40, %c0_41] : memref<8x18x18xf32, #tpu.memory_space<vmem>>, vector<8x16x18xf32>
    tpu.vector_store %arg8[%c0_39, %c1_40, %c0_41], %39 {strides = array<i32>} : memref<8x18x18xf32, #tpu.memory_space<vmem>>, vector<8x16x18xf32>,
    %41 = vector.extract_strided_slice %39 {offsets = [0, 1, 0], sizes = [8, 1, 18], strides = [1, 1, 1]} : vector<8x16x18xf32> to vector<8x1x18xf32>
    %c0_42 = arith.constant 0 : index
    %c0_43 = arith.constant 0 : index
    %c0_44 = arith.constant 0 : index
    %42 = vector.load %arg8[%c0_42, %c0_43, %c0_44] : memref<8x18x18xf32, #tpu.memory_space<vmem>>, vector<8x1x18xf32>
    tpu.vector_store %arg8[%c0_42, %c0_43, %c0_44], %41 {strides = array<i32>} : memref<8x18x18xf32, #tpu.memory_space<vmem>>, vector<8x1x18xf32>,
    %43 = vector.extract_strided_slice %39 {offsets = [0, 14, 0], sizes = [8, 1, 18], strides = [1, 1, 1]} : vector<8x16x18xf32> to vector<8x1x18xf32>
    %c0_45 = arith.constant 0 : index
    %c17_46 = arith.constant 17 : index
    %c0_47 = arith.constant 0 : index
    %44 = vector.load %arg8[%c0_45, %c17_46, %c0_47] : memref<8x18x18xf32, #tpu.memory_space<vmem>>, vector<8x1x18xf32>
    tpu.vector_store %arg8[%c0_45, %c17_46, %c0_47], %43 {strides = array<i32>} : memref<8x18x18xf32, #tpu.memory_space<vmem>>, vector<8x1x18xf32>,
    %c0_48 = arith.constant 0 : index
    %c0_49 = arith.constant 0 : index
    %c0_50 = arith.constant 0 : index
    %45 = vector.load %arg4[%c0_48, %c0_49, %c0_50] : memref<8x18x18xf32, #tpu.memory_space<vmem>>, vector<8x16x18xf32>
    %c0_51 = arith.constant 0 : index
    %c1_52 = arith.constant 1 : index
    %c0_53 = arith.constant 0 : index
    %46 = vector.load %arg4[%c0_51, %c1_52, %c0_53] : memref<8x18x18xf32, #tpu.memory_space<vmem>>, vector<8x16x18xf32>
    %47 = arith.addf %45, %46 : vector<8x16x18xf32>
    %c0_54 = arith.constant 0 : index
    %c2 = arith.constant 2 : index
    %c0_55 = arith.constant 0 : index
    %48 = vector.load %arg4[%c0_54, %c2, %c0_55] : memref<8x18x18xf32, #tpu.memory_space<vmem>>, vector<8x16x18xf32>
    %49 = arith.addf %47, %48 : vector<8x16x18xf32>
    %50 = vector.extract_strided_slice %49 {offsets = [0, 0, 0], sizes = [8, 16, 16], strides = [1, 1, 1]} : vector<8x16x18xf32> to vector<8x16x16xf32>
    %51 = vector.extract_strided_slice %49 {offsets = [0, 0, 1], sizes = [8, 16, 16], strides = [1, 1, 1]} : vector<8x16x18xf32> to vector<8x16x16xf32>
    %52 = arith.addf %50, %51 : vector<8x16x16xf32>
    %53 = vector.extract_strided_slice %49 {offsets = [0, 0, 2], sizes = [8, 16, 16], strides = [1, 1, 1]} : vector<8x16x18xf32> to vector<8x16x16xf32>
    %54 = arith.addf %52, %53 : vector<8x16x16xf32>
    %c0_56 = arith.constant 0 : index
    %c0_57 = arith.constant 0 : index
    %c0_58 = arith.constant 0 : index
    %55 = vector.load %arg5[%c0_56, %c0_57, %c0_58] : memref<8x18x18xf32, #tpu.memory_space<vmem>>, vector<8x16x18xf32>
    %c0_59 = arith.constant 0 : index
    %c1_60 = arith.constant 1 : index
    %c0_61 = arith.constant 0 : index
    %56 = vector.load %arg5[%c0_59, %c1_60, %c0_61] : memref<8x18x18xf32, #tpu.memory_space<vmem>>, vector<8x16x18xf32>
    %57 = arith.addf %55, %56 : vector<8x16x18xf32>
    %c0_62 = arith.constant 0 : index
    %c2_63 = arith.constant 2 : index
    %c0_64 = arith.constant 0 : index
    %58 = vector.load %arg5[%c0_62, %c2_63, %c0_64] : memref<8x18x18xf32, #tpu.memory_space<vmem>>, vector<8x16x18xf32>
    %59 = arith.addf %57, %58 : vector<8x16x18xf32>
    %60 = vector.extract_strided_slice %59 {offsets = [0, 0, 0], sizes = [8, 16, 16], strides = [1, 1, 1]} : vector<8x16x18xf32> to vector<8x16x16xf32>
    %61 = vector.extract_strided_slice %59 {offsets = [0, 0, 1], sizes = [8, 16, 16], strides = [1, 1, 1]} : vector<8x16x18xf32> to vector<8x16x16xf32>
    %62 = arith.addf %60, %61 : vector<8x16x16xf32>
    %63 = vector.extract_strided_slice %59 {offsets = [0, 0, 2], sizes = [8, 16, 16], strides = [1, 1, 1]} : vector<8x16x18xf32> to vector<8x16x16xf32>
    %64 = arith.addf %62, %63 : vector<8x16x16xf32>
    %c0_65 = arith.constant 0 : index
    %c0_66 = arith.constant 0 : index
    %c0_67 = arith.constant 0 : index
    %65 = vector.load %arg6[%c0_65, %c0_66, %c0_67] : memref<8x18x18xf32, #tpu.memory_space<vmem>>, vector<8x16x18xf32>
    %c0_68 = arith.constant 0 : index
    %c1_69 = arith.constant 1 : index
    %c0_70 = arith.constant 0 : index
    %66 = vector.load %arg6[%c0_68, %c1_69, %c0_70] : memref<8x18x18xf32, #tpu.memory_space<vmem>>, vector<8x16x18xf32>
    %67 = arith.addf %65, %66 : vector<8x16x18xf32>
    %c0_71 = arith.constant 0 : index
    %c2_72 = arith.constant 2 : index
    %c0_73 = arith.constant 0 : index
    %68 = vector.load %arg6[%c0_71, %c2_72, %c0_73] : memref<8x18x18xf32, #tpu.memory_space<vmem>>, vector<8x16x18xf32>
    %69 = arith.addf %67, %68 : vector<8x16x18xf32>
    %70 = vector.extract_strided_slice %69 {offsets = [0, 0, 0], sizes = [8, 16, 16], strides = [1, 1, 1]} : vector<8x16x18xf32> to vector<8x16x16xf32>
    %71 = vector.extract_strided_slice %69 {offsets = [0, 0, 1], sizes = [8, 16, 16], strides = [1, 1, 1]} : vector<8x16x18xf32> to vector<8x16x16xf32>
    %72 = arith.addf %70, %71 : vector<8x16x16xf32>
    %73 = vector.extract_strided_slice %69 {offsets = [0, 0, 2], sizes = [8, 16, 16], strides = [1, 1, 1]} : vector<8x16x18xf32> to vector<8x16x16xf32>
    %74 = arith.addf %72, %73 : vector<8x16x16xf32>
    %c0_74 = arith.constant 0 : index
    %c0_75 = arith.constant 0 : index
    %c0_76 = arith.constant 0 : index
    %75 = vector.load %arg7[%c0_74, %c0_75, %c0_76] : memref<8x18x18xf32, #tpu.memory_space<vmem>>, vector<8x16x18xf32>
    %c0_77 = arith.constant 0 : index
    %c1_78 = arith.constant 1 : index
    %c0_79 = arith.constant 0 : index
    %76 = vector.load %arg7[%c0_77, %c1_78, %c0_79] : memref<8x18x18xf32, #tpu.memory_space<vmem>>, vector<8x16x18xf32>
    %77 = arith.addf %75, %76 : vector<8x16x18xf32>
    %c0_80 = arith.constant 0 : index
    %c2_81 = arith.constant 2 : index
    %c0_82 = arith.constant 0 : index
    %78 = vector.load %arg7[%c0_80, %c2_81, %c0_82] : memref<8x18x18xf32, #tpu.memory_space<vmem>>, vector<8x16x18xf32>
    %79 = arith.addf %77, %78 : vector<8x16x18xf32>
    %80 = vector.extract_strided_slice %79 {offsets = [0, 0, 0], sizes = [8, 16, 16], strides = [1, 1, 1]} : vector<8x16x18xf32> to vector<8x16x16xf32>
    %81 = vector.extract_strided_slice %79 {offsets = [0, 0, 1], sizes = [8, 16, 16], strides = [1, 1, 1]} : vector<8x16x18xf32> to vector<8x16x16xf32>
    %82 = arith.addf %80, %81 : vector<8x16x16xf32>
    %83 = vector.extract_strided_slice %79 {offsets = [0, 0, 2], sizes = [8, 16, 16], strides = [1, 1, 1]} : vector<8x16x18xf32> to vector<8x16x16xf32>
    %84 = arith.addf %82, %83 : vector<8x16x16xf32>
    %c0_83 = arith.constant 0 : index
    %c0_84 = arith.constant 0 : index
    %c0_85 = arith.constant 0 : index
    %85 = vector.load %arg8[%c0_83, %c0_84, %c0_85] : memref<8x18x18xf32, #tpu.memory_space<vmem>>, vector<8x16x18xf32>
    %c0_86 = arith.constant 0 : index
    %c1_87 = arith.constant 1 : index
    %c0_88 = arith.constant 0 : index
    %86 = vector.load %arg8[%c0_86, %c1_87, %c0_88] : memref<8x18x18xf32, #tpu.memory_space<vmem>>, vector<8x16x18xf32>
    %87 = arith.addf %85, %86 : vector<8x16x18xf32>
    %c0_89 = arith.constant 0 : index
    %c2_90 = arith.constant 2 : index
    %c0_91 = arith.constant 0 : index
    %88 = vector.load %arg8[%c0_89, %c2_90, %c0_91] : memref<8x18x18xf32, #tpu.memory_space<vmem>>, vector<8x16x18xf32>
    %89 = arith.addf %87, %88 : vector<8x16x18xf32>
    %90 = vector.extract_strided_slice %89 {offsets = [0, 0, 0], sizes = [8, 16, 16], strides = [1, 1, 1]} : vector<8x16x18xf32> to vector<8x16x16xf32>
    %91 = vector.extract_strided_slice %89 {offsets = [0, 0, 1], sizes = [8, 16, 16], strides = [1, 1, 1]} : vector<8x16x18xf32> to vector<8x16x16xf32>
    %92 = arith.addf %90, %91 : vector<8x16x16xf32>
    %93 = vector.extract_strided_slice %89 {offsets = [0, 0, 2], sizes = [8, 16, 16], strides = [1, 1, 1]} : vector<8x16x18xf32> to vector<8x16x16xf32>
    %94 = arith.addf %92, %93 : vector<8x16x16xf32>
    %95 = arith.mulf %54, %64 : vector<8x16x16xf32>
    %96 = arith.mulf %54, %54 : vector<8x16x16xf32>
    %97 = arith.mulf %64, %64 : vector<8x16x16xf32>
    %98 = arith.addf %96, %97 : vector<8x16x16xf32>
    %cst = arith.constant 2.000000e+00 : f32
    %99 = vector.broadcast %cst : f32 to vector<8x16x16xf32>
    %100 = arith.mulf %99, %95 : vector<8x16x16xf32>
    %cst_92 = arith.constant 8.100000e-03 : f32
    %101 = vector.broadcast %cst_92 : f32 to vector<8x16x16xf32>
    %102 = arith.addf %100, %101 : vector<8x16x16xf32>
    %cst_93 = arith.constant 1.800000e+01 : f32
    %103 = vector.broadcast %cst_93 : f32 to vector<8x16x16xf32>
    %104 = arith.mulf %103, %94 : vector<8x16x16xf32>
    %cst_94 = arith.constant 2.000000e+00 : f32
    %105 = vector.broadcast %cst_94 : f32 to vector<8x16x16xf32>
    %106 = arith.mulf %105, %95 : vector<8x16x16xf32>
    %107 = arith.subf %104, %106 : vector<8x16x16xf32>
    %cst_95 = arith.constant 7.290000e-02 : f32
    %108 = vector.broadcast %cst_95 : f32 to vector<8x16x16xf32>
    %109 = arith.addf %107, %108 : vector<8x16x16xf32>
    %110 = arith.mulf %102, %109 : vector<8x16x16xf32>
    %cst_96 = arith.constant 8.100000e-03 : f32
    %111 = vector.broadcast %cst_96 : f32 to vector<8x16x16xf32>
    %112 = arith.addf %98, %111 : vector<8x16x16xf32>
    %113 = arith.addf %74, %84 : vector<8x16x16xf32>
    %cst_97 = arith.constant 9.000000e+00 : f32
    %114 = vector.broadcast %cst_97 : f32 to vector<8x16x16xf32>
    %115 = arith.mulf %114, %113 : vector<8x16x16xf32>
    %116 = arith.subf %115, %98 : vector<8x16x16xf32>
    %cst_98 = arith.constant 7.290000e-02 : f32
    %117 = vector.broadcast %cst_98 : f32 to vector<8x16x16xf32>
    %118 = arith.addf %116, %117 : vector<8x16x16xf32>
    %119 = arith.mulf %112, %118 : vector<8x16x16xf32>
    %120 = tpu.reciprocal %119 {approx = true} : vector<8x16x16xf32> -> vector<8x16x16xf32>
    %121 = arith.mulf %119, %120 : vector<8x16x16xf32>
    %cst_99 = arith.constant 2.000000e+00 : f32
    %122 = vector.broadcast %cst_99 : f32 to vector<8x16x16xf32>
    %123 = arith.subf %122, %121 : vector<8x16x16xf32>
    %124 = arith.mulf %120, %123 : vector<8x16x16xf32>
    %125 = arith.mulf %110, %124 : vector<8x16x16xf32>
    %cst_100 = arith.constant 1.000000e+00 : f32
    %126 = vector.broadcast %cst_100 : f32 to vector<8x16x16xf32>
    %127 = arith.subf %126, %125 : vector<8x16x16xf32>
    %cst_101 = arith.constant 5.000000e-01 : f32
    %128 = vector.broadcast %cst_101 : f32 to vector<8x16x16xf32>
    %129 = arith.mulf %127, %128 : vector<8x16x16xf32>
    %cst_102 = arith.constant 0.000000e+00 : f32
    %cst_103 = arith.constant 1.000000e+00 : f32
    %130 = vector.broadcast %cst_102 : f32 to vector<8x16x16xf32>
    %131 = arith.maximumf %130, %129 : vector<8x16x16xf32>
    %132 = vector.broadcast %cst_103 : f32 to vector<8x16x16xf32>
    %133 = arith.minimumf %132, %131 : vector<8x16x16xf32>
    %c0_104 = arith.constant 0 : index
    %c0_105 = arith.constant 0 : index
    %c0_106 = arith.constant 0 : index
    %134 = vector.load %arg3[%c0_104, %c0_105, %c0_106] : memref<8x16x16xf32, #tpu.memory_space<vmem>>, vector<8x16x16xf32>
    tpu.vector_store %arg3[%c0_104, %c0_105, %c0_106], %133 {strides = array<i32>} : memref<8x16x16xf32, #tpu.memory_space<vmem>>, vector<8x16x16xf32>,
    return
  }
  func.func @transform_0(%arg0: i32) -> (i32, i32, i32) {
    %c0_i32 = arith.constant 0 : i32
    %c0_i32_0 = arith.constant 0 : i32
    %c0_i32_1 = arith.constant 0 : i32
    return %arg0, %c0_i32, %c0_i32_0 : i32, i32, i32
  }
  func.func @transform_1(%arg0: i32) -> (i32, i32, i32) {
    %c0_i32 = arith.constant 0 : i32
    %c0_i32_0 = arith.constant 0 : i32
    %c0_i32_1 = arith.constant 0 : i32
    return %arg0, %c0_i32, %c0_i32_0 : i32, i32, i32
  }
  func.func @transform_2(%arg0: i32) -> (i32, i32, i32) {
    %c0_i32 = arith.constant 0 : i32
    %c0_i32_0 = arith.constant 0 : i32
    %c0_i32_1 = arith.constant 0 : i32
    return %arg0, %c0_i32, %c0_i32_0 : i32, i32, i32
  }
}

</mosaic_0001>

<llo_original>
// kernel: tpu_custom_call.1
$region0: #{tpu_custom_call.1}
  #allocation0 [shape = 'u32[]', space=smem, size = 0x4, offset = 0x4, fixed_abs, tag = 'smem constant byte address 0x4 - core index']
  #allocation1 [shape = 'u32[72,128]{1,0:T(1,128)}', space=vmem, size = 0x9000, scoped, tag = 'internal scratch']
  #allocation2 [shape = 'f32[8,18,18]{2,1,0:T(8,128)}', space=vmem, size = 0x18000, scoped, tag = 'scratch operand']
  #allocation3 [shape = 'f32[8,18,18]{2,1,0:T(8,128)}', space=vmem, size = 0x18000, scoped, tag = 'scratch operand']
  #allocation4 [shape = 'f32[8,18,18]{2,1,0:T(8,128)}', space=vmem, size = 0x18000, scoped, tag = 'scratch operand']
  #allocation5 [shape = 'f32[8,18,18]{2,1,0:T(8,128)}', space=vmem, size = 0x18000, scoped, tag = 'scratch operand']
  #allocation6 [shape = 'f32[8,18,18]{2,1,0:T(8,128)}', space=vmem, size = 0x18000, scoped, tag = 'scratch operand']
  %s0 = inlined_call_operand.hbm [shape: f32[8,16,16], index: 0, kind: input, shape index: {}]
  %s1 = inlined_call_operand.hbm [shape: f32[8,16,16], index: 1, kind: input, shape index: {}]
  %s2 = inlined_call_operand.hbm [shape: f32[8,16,16], index: 2, kind: output, shape index: {}]
  %s3 = sld [smem:[#allocation0]]
  $region26: #{tpu_custom_call.1} parent=0
    _
  %s5 = ssub.s32 1, %s3
  %s6 = scalar_select 0, %s5, %s3
  $region1: #{tpu_custom_call.1} parent=0
    #allocation7 [shape = 'u8[65536]{0}', space=vmem, size = 0x10000, scoped, tag = 'input window, operand 0, single buffered']
    #allocation8 [shape = 's32[1]{0}', space=sflag, size = 0x4, scoped, tag = 'scoped memory for tpu_custom_call.1']
    #allocation9 [shape = 's32[1]{0}', space=sflag, size = 0x4, scoped, tag = 'scoped memory for tpu_custom_call.1']
    #allocation10 [shape = 'u8[65536]{0}', space=vmem, size = 0x10000, scoped, tag = 'input window, operand 1, single buffered']
    #allocation11 [shape = 's32[1]{0}', space=sflag, size = 0x4, scoped, tag = 'scoped memory for tpu_custom_call.1']
    #allocation12 [shape = 'u8[65536]{0}', space=vmem, size = 0x10000, scoped, tag = 'output window, operand 0, single buffered']
    %7 = vsyncpa [#allocation8], 0
    %8 = vsyncpa [#allocation11], 0
    %9 = vsyncpa [#allocation9], 0
    // Predicated region
    $region2: #{tpu_custom_call.1} parent=1 // pred_check
      _
    $region3: #{tpu_custom_call.1} parent=1 // pred_check_branch
      %11 = sbr.rel (0) target = $region5
    $region4: #{tpu_custom_call.1} parent=1 // pred_region
      %13 = vsyncadd [#allocation8], 0
      %s14 = sshll.u32 %s0, 4
      %s15 = int_to_ptr.hbm [resolvable:$true] %s14
      %s16 = sshll.u32 [#allocation7], 4
      %s17 = int_to_ptr.vmem [resolvable:$true] %s16
      %22 = dma.hbm_to_vmem [thread:$0]  %s15, 2048, %s17, [#allocation8], 128, 128, 8
    $region5: #{tpu_custom_call.1} parent=1 // pred_fallthru
      _
    // Predicated region
    $region6: #{tpu_custom_call.1} parent=1 // pred_check
      _
    $region7: #{tpu_custom_call.1} parent=1 // pred_check_branch
      %24 = sbr.rel (0) target = $region9
    $region8: #{tpu_custom_call.1} parent=1 // pred_region
      %26 = vsyncadd [#allocation11], 0
      %s27 = sshll.u32 %s1, 4
      %s28 = int_to_ptr.hbm [resolvable:$true] %s27
      %s29 = sshll.u32 [#allocation10], 4
      %s30 = int_to_ptr.vmem [resolvable:$true] %s29
      %35 = dma.hbm_to_vmem [thread:$0]  %s28, 2048, %s30, [#allocation11], 128, 128, 8
    $region9: #{tpu_custom_call.1} parent=1 // pred_fallthru
      _
    // Predicated region
    $region10: #{tpu_custom_call.1} parent=1 // pred_check
      _
    $region11: #{tpu_custom_call.1} parent=1 // pred_check_branch
      %37 = sbr.rel (0) target = $region13
    $region12: #{tpu_custom_call.1} parent=1 // pred_region
      %39 = dma.done [#allocation8], 2048
    $region13: #{tpu_custom_call.1} parent=1 // pred_fallthru
      _
    // Predicated region
    $region14: #{tpu_custom_call.1} parent=1 // pred_check
      _
    $region15: #{tpu_custom_call.1} parent=1 // pred_check_branch
      %41 = sbr.rel (0) target = $region17
    $region16: #{tpu_custom_call.1} parent=1 // pred_region
      %43 = dma.done [#allocation11], 2048
    $region17: #{tpu_custom_call.1} parent=1 // pred_fallthru
      _
    %v44 = vld [vmem:[#allocation7] sm:$0xff]
    %v45 = vld [vmem:[#allocation7 + $0x8] sm:$0xff]
    %v46 = vld [vmem:[#allocation7 + $0x10] sm:$0xff]
    %v47 = vld [vmem:[#allocation7 + $0x18] sm:$0xff]
    %v48 = vld [vmem:[#allocation7 + $0x20] sm:$0xff]
    %v49 = vld [vmem:[#allocation7 + $0x28] sm:$0xff]
    %v50 = vld [vmem:[#allocation7 + $0x30] sm:$0xff]
    %v51 = vld [vmem:[#allocation7 + $0x38] sm:$0xff]
    %v52 = vld [vmem:[#allocation7 + $0x40] sm:$0xff]
    %v53 = vld [vmem:[#allocation7 + $0x48] sm:$0xff]
    %v54 = vld [vmem:[#allocation7 + $0x50] sm:$0xff]
    %v55 = vld [vmem:[#allocation7 + $0x58] sm:$0xff]
    %v56 = vld [vmem:[#allocation7 + $0x60] sm:$0xff]
    %v57 = vld [vmem:[#allocation7 + $0x68] sm:$0xff]
    %v58 = vld [vmem:[#allocation7 + $0x70] sm:$0xff]
    %v59 = vld [vmem:[#allocation7 + $0x78] sm:$0xff]
    %v60 = vld [vmem:[#allocation10] sm:$0xff]
    %v61 = vld [vmem:[#allocation10 + $0x8] sm:$0xff]
    %v62 = vld [vmem:[#allocation10 + $0x10] sm:$0xff]
    %v63 = vld [vmem:[#allocation10 + $0x18] sm:$0xff]
    %v64 = vld [vmem:[#allocation10 + $0x20] sm:$0xff]
    %v65 = vld [vmem:[#allocation10 + $0x28] sm:$0xff]
    %v66 = vld [vmem:[#allocation10 + $0x30] sm:$0xff]
    %v67 = vld [vmem:[#allocation10 + $0x38] sm:$0xff]
    %v68 = vld [vmem:[#allocation10 + $0x40] sm:$0xff]
    %v69 = vld [vmem:[#allocation10 + $0x48] sm:$0xff]
    %v70 = vld [vmem:[#allocation10 + $0x50] sm:$0xff]
    %v71 = vld [vmem:[#allocation10 + $0x58] sm:$0xff]
    %v72 = vld [vmem:[#allocation10 + $0x60] sm:$0xff]
    %v73 = vld [vmem:[#allocation10 + $0x68] sm:$0xff]
    %v74 = vld [vmem:[#allocation10 + $0x70] sm:$0xff]
    %v75 = vld [vmem:[#allocation10 + $0x78] sm:$0xff]
    %92 = vrot.lane.b32.xlu0 %v44, 127
    %v93 = vpop.permute.xlu0 %92
    %94 = vrot.lane.b32.xlu0 %v45, 127
    %v95 = vpop.permute.xlu0 %94
    %96 = vrot.lane.b32.xlu0 %v46, 127
    %v97 = vpop.permute.xlu0 %96
    %98 = vrot.lane.b32.xlu0 %v47, 127
    %v99 = vpop.permute.xlu0 %98
    %100 = vrot.lane.b32.xlu0 %v48, 127
    %v101 = vpop.permute.xlu0 %100
    %102 = vrot.lane.b32.xlu0 %v49, 127
    %v103 = vpop.permute.xlu0 %102
    %104 = vrot.lane.b32.xlu0 %v50, 127
    %v105 = vpop.permute.xlu0 %104
    %106 = vrot.lane.b32.xlu0 %v51, 127
    %v107 = vpop.permute.xlu0 %106
    %108 = vrot.lane.b32.xlu0 %v52, 127
    %v109 = vpop.permute.xlu0 %108
    %110 = vrot.lane.b32.xlu0 %v53, 127
    %v111 = vpop.permute.xlu0 %110
    %112 = vrot.lane.b32.xlu0 %v54, 127
    %v113 = vpop.permute.xlu0 %112
    %114 = vrot.lane.b32.xlu0 %v55, 127
    %v115 = vpop.permute.xlu0 %114
    %116 = vrot.lane.b32.xlu0 %v56, 127
    %v117 = vpop.permute.xlu0 %116
    %118 = vrot.lane.b32.xlu0 %v57, 127
    %v119 = vpop.permute.xlu0 %118
    %120 = vrot.lane.b32.xlu0 %v58, 127
    %v121 = vpop.permute.xlu0 %120
    %122 = vrot.lane.b32.xlu0 %v59, 127
    %v123 = vpop.permute.xlu0 %122
    %140 = vrot.lane.b32.xlu0 %v44, 1
    %v141 = vpop.permute.xlu0 %140
    %142 = vrot.lane.b32.xlu0 %v45, 1
    %v143 = vpop.permute.xlu0 %142
    %144 = vrot.lane.b32.xlu0 %v46, 1
    %v145 = vpop.permute.xlu0 %144
    %146 = vrot.lane.b32.xlu0 %v47, 1
    %v147 = vpop.permute.xlu0 %146
    %148 = vrot.lane.b32.xlu0 %v48, 1
    %v149 = vpop.permute.xlu0 %148
    %150 = vrot.lane.b32.xlu0 %v49, 1
    %v151 = vpop.permute.xlu0 %150
    %152 = vrot.lane.b32.xlu0 %v50, 1
    %v153 = vpop.permute.xlu0 %152
    %154 = vrot.lane.b32.xlu0 %v51, 1
    %v155 = vpop.permute.xlu0 %154
    %156 = vrot.lane.b32.xlu0 %v52, 1
    %v157 = vpop.permute.xlu0 %156
    %158 = vrot.lane.b32.xlu0 %v53, 1
    %v159 = vpop.permute.xlu0 %158
    %160 = vrot.lane.b32.xlu0 %v54, 1
    %v161 = vpop.permute.xlu0 %160
    %162 = vrot.lane.b32.xlu0 %v55, 1
    %v163 = vpop.permute.xlu0 %162
    %164 = vrot.lane.b32.xlu0 %v56, 1
    %v165 = vpop.permute.xlu0 %164
    %166 = vrot.lane.b32.xlu0 %v57, 1
    %v167 = vpop.permute.xlu0 %166
    %168 = vrot.lane.b32.xlu0 %v58, 1
    %v169 = vpop.permute.xlu0 %168
    %170 = vrot.lane.b32.xlu0 %v59, 1
    %v171 = vpop.permute.xlu0 %170
    %188 = vrot.lane.b32.xlu0 %v44, 3
    %v189 = vpop.permute.xlu0 %188
    %190 = vrot.lane.b32.xlu0 %v45, 3
    %v191 = vpop.permute.xlu0 %190
    %192 = vrot.lane.b32.xlu0 %v46, 3
    %v193 = vpop.permute.xlu0 %192
    %194 = vrot.lane.b32.xlu0 %v47, 3
    %v195 = vpop.permute.xlu0 %194
    %196 = vrot.lane.b32.xlu0 %v48, 3
    %v197 = vpop.permute.xlu0 %196
    %198 = vrot.lane.b32.xlu0 %v49, 3
    %v199 = vpop.permute.xlu0 %198
    %200 = vrot.lane.b32.xlu0 %v50, 3
    %v201 = vpop.permute.xlu0 %200
    %202 = vrot.lane.b32.xlu0 %v51, 3
    %v203 = vpop.permute.xlu0 %202
    %204 = vrot.lane.b32.xlu0 %v52, 3
    %v205 = vpop.permute.xlu0 %204
    %206 = vrot.lane.b32.xlu0 %v53, 3
    %v207 = vpop.permute.xlu0 %206
    %208 = vrot.lane.b32.xlu0 %v54, 3
    %v209 = vpop.permute.xlu0 %208
    %210 = vrot.lane.b32.xlu0 %v55, 3
    %v211 = vpop.permute.xlu0 %210
    %212 = vrot.lane.b32.xlu0 %v56, 3
    %v213 = vpop.permute.xlu0 %212
    %214 = vrot.lane.b32.xlu0 %v57, 3
    %v215 = vpop.permute.xlu0 %214
    %216 = vrot.lane.b32.xlu0 %v58, 3
    %v217 = vpop.permute.xlu0 %216
    %218 = vrot.lane.b32.xlu0 %v59, 3
    %v219 = vpop.permute.xlu0 %218
    %vm236 = vcmask 7168
    %v237 = vsel %vm236, %v93, %v141
    %v238 = vsel %vm236, %v95, %v143
    %v239 = vsel %vm236, %v97, %v145
    %v240 = vsel %vm236, %v99, %v147
    %v241 = vsel %vm236, %v101, %v149
    %v242 = vsel %vm236, %v103, %v151
    %v243 = vsel %vm236, %v105, %v153
    %v244 = vsel %vm236, %v107, %v155
    %v245 = vsel %vm236, %v109, %v157
    %v246 = vsel %vm236, %v111, %v159
    %v247 = vsel %vm236, %v113, %v161
    %v248 = vsel %vm236, %v115, %v163
    %v249 = vsel %vm236, %v117, %v165
    %v250 = vsel %vm236, %v119, %v167
    %v251 = vsel %vm236, %v121, %v169
    %v252 = vsel %vm236, %v123, %v171
    %vm253 = vcmask 138240
    %v254 = vsel %vm253, %v237, %v189
    %v255 = vsel %vm253, %v238, %v191
    %v256 = vsel %vm253, %v239, %v193
    %v257 = vsel %vm253, %v240, %v195
    %v258 = vsel %vm253, %v241, %v197
    %v259 = vsel %vm253, %v242, %v199
    %v260 = vsel %vm253, %v243, %v201
    %v261 = vsel %vm253, %v244, %v203
    %v262 = vsel %vm253, %v245, %v205
    %v263 = vsel %vm253, %v246, %v207
    %v264 = vsel %vm253, %v247, %v209
    %v265 = vsel %vm253, %v248, %v211
    %v266 = vsel %vm253, %v249, %v213
    %v267 = vsel %vm253, %v250, %v215
    %v268 = vsel %vm253, %v251, %v217
    %v269 = vsel %vm253, %v252, %v219
    %vm270 = vcmask 146432
    %271 = vst.msk [vmem:[#allocation2 + $0x1] sm:$0xff] %vm270, %v254
    %272 = vst.msk [vmem:[#allocation2 + $0x9] sm:$0xff] %vm270, %v255
    %273 = vst.msk [vmem:[#allocation2 + $0x19] sm:$0xff] %vm270, %v256
    %274 = vst.msk [vmem:[#allocation2 + $0x21] sm:$0xff] %vm270, %v257
    %275 = vst.msk [vmem:[#allocation2 + $0x31] sm:$0xff] %vm270, %v258
    %276 = vst.msk [vmem:[#allocation2 + $0x39] sm:$0xff] %vm270, %v259
    %277 = vst.msk [vmem:[#allocation2 + $0x49] sm:$0xff] %vm270, %v260
    %278 = vst.msk [vmem:[#allocation2 + $0x51] sm:$0xff] %vm270, %v261
    %279 = vst.msk [vmem:[#allocation2 + $0x61] sm:$0xff] %vm270, %v262
    %280 = vst.msk [vmem:[#allocation2 + $0x69] sm:$0xff] %vm270, %v263
    %281 = vst.msk [vmem:[#allocation2 + $0x79] sm:$0xff] %vm270, %v264
    %282 = vst.msk [vmem:[#allocation2 + $0x81] sm:$0xff] %vm270, %v265
    %283 = vst.msk [vmem:[#allocation2 + $0x91] sm:$0xff] %vm270, %v266
    %284 = vst.msk [vmem:[#allocation2 + $0x99] sm:$0xff] %vm270, %v267
    %285 = vst.msk [vmem:[#allocation2 + $0xa9] sm:$0xff] %vm270, %v268
    %286 = vst.msk [vmem:[#allocation2 + $0xb1] sm:$0xff] %vm270, %v269
    %vm287 = vcmask 140289
    %288 = vst.msk [vmem:[#allocation2 - $0x1] sm:$0x2] %vm287, %v254
    %289 = vst.msk [vmem:[#allocation2 + $0x17] sm:$0x2] %vm287, %v256
    %290 = vst.msk [vmem:[#allocation2 + $0x2f] sm:$0x2] %vm287, %v258
    %291 = vst.msk [vmem:[#allocation2 + $0x47] sm:$0x2] %vm287, %v260
    %292 = vst.msk [vmem:[#allocation2 + $0x5f] sm:$0x2] %vm287, %v262
    %293 = vst.msk [vmem:[#allocation2 + $0x77] sm:$0x2] %vm287, %v264
    %294 = vst.msk [vmem:[#allocation2 + $0x8f] sm:$0x2] %vm287, %v266
    %295 = vst.msk [vmem:[#allocation2 + $0xa7] sm:$0x2] %vm287, %v268
    %vm296 = vcmask 145414
    %297 = vst.msk [vmem:[#allocation2 + $0xb] sm:$0x40] %vm296, %v255
    %298 = vst.msk [vmem:[#allocation2 + $0x23] sm:$0x40] %vm296, %v257
    %299 = vst.msk [vmem:[#allocation2 + $0x3b] sm:$0x40] %vm296, %v259
    %300 = vst.msk [vmem:[#allocation2 + $0x53] sm:$0x40] %vm296, %v261
    %301 = vst.msk [vmem:[#allocation2 + $0x6b] sm:$0x40] %vm296, %v263
    %302 = vst.msk [vmem:[#allocation2 + $0x83] sm:$0x40] %vm296, %v265
    %303 = vst.msk [vmem:[#allocation2 + $0x9b] sm:$0x40] %vm296, %v267
    %304 = vst.msk [vmem:[#allocation2 + $0xb3] sm:$0x40] %vm296, %v269
    %321 = vrot.lane.b32.xlu0 %v60, 127
    %v322 = vpop.permute.xlu0 %321
    %323 = vrot.lane.b32.xlu0 %v61, 127
    %v324 = vpop.permute.xlu0 %323
    %325 = vrot.lane.b32.xlu0 %v62, 127
    %v326 = vpop.permute.xlu0 %325
    %327 = vrot.lane.b32.xlu0 %v63, 127
    %v328 = vpop.permute.xlu0 %327
    %329 = vrot.lane.b32.xlu0 %v64, 127
    %v330 = vpop.permute.xlu0 %329
    %331 = vrot.lane.b32.xlu0 %v65, 127
    %v332 = vpop.permute.xlu0 %331
    %333 = vrot.lane.b32.xlu0 %v66, 127
    %v334 = vpop.permute.xlu0 %333
    %335 = vrot.lane.b32.xlu0 %v67, 127
    %v336 = vpop.permute.xlu0 %335
    %337 = vrot.lane.b32.xlu0 %v68, 127
    %v338 = vpop.permute.xlu0 %337
    %339 = vrot.lane.b32.xlu0 %v69, 127
    %v340 = vpop.permute.xlu0 %339
    %341 = vrot.lane.b32.xlu0 %v70, 127
    %v342 = vpop.permute.xlu0 %341
    %343 = vrot.lane.b32.xlu0 %v71, 127
    %v344 = vpop.permute.xlu0 %343
    %345 = vrot.lane.b32.xlu0 %v72, 127
    %v346 = vpop.permute.xlu0 %345
    %347 = vrot.lane.b32.xlu0 %v73, 127
    %v348 = vpop.permute.xlu0 %347
    %349 = vrot.lane.b32.xlu0 %v74, 127
    %v350 = vpop.permute.xlu0 %349
    %351 = vrot.lane.b32.xlu0 %v75, 127
    %v352 = vpop.permute.xlu0 %351
    %369 = vrot.lane.b32.xlu0 %v60, 1
    %v370 = vpop.permute.xlu0 %369
    %371 = vrot.lane.b32.xlu0 %v61, 1
    %v372 = vpop.permute.xlu0 %371
    %373 = vrot.lane.b32.xlu0 %v62, 1
    %v374 = vpop.permute.xlu0 %373
    %375 = vrot.lane.b32.xlu0 %v63, 1
    %v376 = vpop.permute.xlu0 %375
    %377 = vrot.lane.b32.xlu0 %v64, 1
    %v378 = vpop.permute.xlu0 %377
    %379 = vrot.lane.b32.xlu0 %v65, 1
    %v380 = vpop.permute.xlu0 %379
    %381 = vrot.lane.b32.xlu0 %v66, 1
    %v382 = vpop.permute.xlu0 %381
    %383 = vrot.lane.b32.xlu0 %v67, 1
    %v384 = vpop.permute.xlu0 %383
    %385 = vrot.lane.b32.xlu0 %v68, 1
    %v386 = vpop.permute.xlu0 %385
    %387 = vrot.lane.b32.xlu0 %v69, 1
    %v388 = vpop.permute.xlu0 %387
    %389 = vrot.lane.b32.xlu0 %v70, 1
    %v390 = vpop.permute.xlu0 %389
    %391 = vrot.lane.b32.xlu0 %v71, 1
    %v392 = vpop.permute.xlu0 %391
    %393 = vrot.lane.b32.xlu0 %v72, 1
    %v394 = vpop.permute.xlu0 %393
    %395 = vrot.lane.b32.xlu0 %v73, 1
    %v396 = vpop.permute.xlu0 %395
    %397 = vrot.lane.b32.xlu0 %v74, 1
    %v398 = vpop.permute.xlu0 %397
    %399 = vrot.lane.b32.xlu0 %v75, 1
    %v400 = vpop.permute.xlu0 %399
    %417 = vrot.lane.b32.xlu0 %v60, 3
    %v418 = vpop.permute.xlu0 %417
    %419 = vrot.lane.b32.xlu0 %v61, 3
    %v420 = vpop.permute.xlu0 %419
    %421 = vrot.lane.b32.xlu0 %v62, 3
    %v422 = vpop.permute.xlu0 %421
    %423 = vrot.lane.b32.xlu0 %v63, 3
    %v424 = vpop.permute.xlu0 %423
    %425 = vrot.lane.b32.xlu0 %v64, 3
    %v426 = vpop.permute.xlu0 %425
    %427 = vrot.lane.b32.xlu0 %v65, 3
    %v428 = vpop.permute.xlu0 %427
    %429 = vrot.lane.b32.xlu0 %v66, 3
    %v430 = vpop.permute.xlu0 %429
    %431 = vrot.lane.b32.xlu0 %v67, 3
    %v432 = vpop.permute.xlu0 %431
    %433 = vrot.lane.b32.xlu0 %v68, 3
    %v434 = vpop.permute.xlu0 %433
    %435 = vrot.lane.b32.xlu0 %v69, 3
    %v436 = vpop.permute.xlu0 %435
    %437 = vrot.lane.b32.xlu0 %v70, 3
    %v438 = vpop.permute.xlu0 %437
    %439 = vrot.lane.b32.xlu0 %v71, 3
    %v440 = vpop.permute.xlu0 %439
    %441 = vrot.lane.b32.xlu0 %v72, 3
    %v442 = vpop.permute.xlu0 %441
    %443 = vrot.lane.b32.xlu0 %v73, 3
    %v444 = vpop.permute.xlu0 %443
    %445 = vrot.lane.b32.xlu0 %v74, 3
    %v446 = vpop.permute.xlu0 %445
    %447 = vrot.lane.b32.xlu0 %v75, 3
    %v448 = vpop.permute.xlu0 %447
    %v465 = vsel %vm236, %v322, %v370
    %v466 = vsel %vm236, %v324, %v372
    %v467 = vsel %vm236, %v326, %v374
    %v468 = vsel %vm236, %v328, %v376
    %v469 = vsel %vm236, %v330, %v378
    %v470 = vsel %vm236, %v332, %v380
    %v471 = vsel %vm236, %v334, %v382
    %v472 = vsel %vm236, %v336, %v384
    %v473 = vsel %vm236, %v338, %v386
    %v474 = vsel %vm236, %v340, %v388
    %v475 = vsel %vm236, %v342, %v390
    %v476 = vsel %vm236, %v344, %v392
    %v477 = vsel %vm236, %v346, %v394
    %v478 = vsel %vm236, %v348, %v396
    %v479 = vsel %vm236, %v350, %v398
    %v480 = vsel %vm236, %v352, %v400
    %v481 = vsel %vm253, %v465, %v418
    %v482 = vsel %vm253, %v466, %v420
    %v483 = vsel %vm253, %v467, %v422
    %v484 = vsel %vm253, %v468, %v424
    %v485 = vsel %vm253, %v469, %v426
    %v486 = vsel %vm253, %v470, %v428
    %v487 = vsel %vm253, %v471, %v430
    %v488 = vsel %vm253, %v472, %v432
    %v489 = vsel %vm253, %v473, %v434
    %v490 = vsel %vm253, %v474, %v436
    %v491 = vsel %vm253, %v475, %v438
    %v492 = vsel %vm253, %v476, %v440
    %v493 = vsel %vm253, %v477, %v442
    %v494 = vsel %vm253, %v478, %v444
    %v495 = vsel %vm253, %v479, %v446
    %v496 = vsel %vm253, %v480, %v448
    %497 = vst.msk [vmem:[#allocation3 + $0x1] sm:$0xff] %vm270, %v481
    %498 = vst.msk [vmem:[#allocation3 + $0x9] sm:$0xff] %vm270, %v482
    %499 = vst.msk [vmem:[#allocation3 + $0x19] sm:$0xff] %vm270, %v483
    %500 = vst.msk [vmem:[#allocation3 + $0x21] sm:$0xff] %vm270, %v484
    %501 = vst.msk [vmem:[#allocation3 + $0x31] sm:$0xff] %vm270, %v485
    %502 = vst.msk [vmem:[#allocation3 + $0x39] sm:$0xff] %vm270, %v486
    %503 = vst.msk [vmem:[#allocation3 + $0x49] sm:$0xff] %vm270, %v487
    %504 = vst.msk [vmem:[#allocation3 + $0x51] sm:$0xff] %vm270, %v488
    %505 = vst.msk [vmem:[#allocation3 + $0x61] sm:$0xff] %vm270, %v489
    %506 = vst.msk [vmem:[#allocation3 + $0x69] sm:$0xff] %vm270, %v490
    %507 = vst.msk [vmem:[#allocation3 + $0x79] sm:$0xff] %vm270, %v491
    %508 = vst.msk [vmem:[#allocation3 + $0x81] sm:$0xff] %vm270, %v492
    %509 = vst.msk [vmem:[#allocation3 + $0x91] sm:$0xff] %vm270, %v493
    %510 = vst.msk [vmem:[#allocation3 + $0x99] sm:$0xff] %vm270, %v494
    %511 = vst.msk [vmem:[#allocation3 + $0xa9] sm:$0xff] %vm270, %v495
    %512 = vst.msk [vmem:[#allocation3 + $0xb1] sm:$0xff] %vm270, %v496
    %513 = vst.msk [vmem:[#allocation3 - $0x1] sm:$0x2] %vm287, %v481
    %514 = vst.msk [vmem:[#allocation3 + $0x17] sm:$0x2] %vm287, %v483
    %515 = vst.msk [vmem:[#allocation3 + $0x2f] sm:$0x2] %vm287, %v485
    %516 = vst.msk [vmem:[#allocation3 + $0x47] sm:$0x2] %vm287, %v487
    %517 = vst.msk [vmem:[#allocation3 + $0x5f] sm:$0x2] %vm287, %v489
    %518 = vst.msk [vmem:[#allocation3 + $0x77] sm:$0x2] %vm287, %v491
    %519 = vst.msk [vmem:[#allocation3 + $0x8f] sm:$0x2] %vm287, %v493
    %520 = vst.msk [vmem:[#allocation3 + $0xa7] sm:$0x2] %vm287, %v495
    %521 = vst.msk [vmem:[#allocation3 + $0xb] sm:$0x40] %vm296, %v482
    %522 = vst.msk [vmem:[#allocation3 + $0x23] sm:$0x40] %vm296, %v484
    %523 = vst.msk [vmem:[#allocation3 + $0x3b] sm:$0x40] %vm296, %v486
    %524 = vst.msk [vmem:[#allocation3 + $0x53] sm:$0x40] %vm296, %v488
    %525 = vst.msk [vmem:[#allocation3 + $0x6b] sm:$0x40] %vm296, %v490
    %526 = vst.msk [vmem:[#allocation3 + $0x83] sm:$0x40] %vm296, %v492
    %527 = vst.msk [vmem:[#allocation3 + $0x9b] sm:$0x40] %vm296, %v494
    %528 = vst.msk [vmem:[#allocation3 + $0xb3] sm:$0x40] %vm296, %v496
    %v529 = vmul.f32 %v44, %v44
    %v530 = vmul.f32 %v45, %v45
    %v531 = vmul.f32 %v46, %v46
    %v532 = vmul.f32 %v47, %v47
    %v533 = vmul.f32 %v48, %v48
    %v534 = vmul.f32 %v49, %v49
    %v535 = vmul.f32 %v50, %v50
    %v536 = vmul.f32 %v51, %v51
    %v537 = vmul.f32 %v52, %v52
    %v538 = vmul.f32 %v53, %v53
    %v539 = vmul.f32 %v54, %v54
    %v540 = vmul.f32 %v55, %v55
    %v541 = vmul.f32 %v56, %v56
    %v542 = vmul.f32 %v57, %v57
    %v543 = vmul.f32 %v58, %v58
    %v544 = vmul.f32 %v59, %v59
    %561 = vrot.lane.b32.xlu0 %v529, 127
    %v562 = vpop.permute.xlu0 %561
    %563 = vrot.lane.b32.xlu0 %v530, 127
    %v564 = vpop.permute.xlu0 %563
    %565 = vrot.lane.b32.xlu0 %v531, 127
    %v566 = vpop.permute.xlu0 %565
    %567 = vrot.lane.b32.xlu0 %v532, 127
    %v568 = vpop.permute.xlu0 %567
    %569 = vrot.lane.b32.xlu0 %v533, 127
    %v570 = vpop.permute.xlu0 %569
    %571 = vrot.lane.b32.xlu0 %v534, 127
    %v572 = vpop.permute.xlu0 %571
    %573 = vrot.lane.b32.xlu0 %v535, 127
    %v574 = vpop.permute.xlu0 %573
    %575 = vrot.lane.b32.xlu0 %v536, 127
    %v576 = vpop.permute.xlu0 %575
    %577 = vrot.lane.b32.xlu0 %v537, 127
    %v578 = vpop.permute.xlu0 %577
    %579 = vrot.lane.b32.xlu0 %v538, 127
    %v580 = vpop.permute.xlu0 %579
    %581 = vrot.lane.b32.xlu0 %v539, 127
    %v582 = vpop.permute.xlu0 %581
    %583 = vrot.lane.b32.xlu0 %v540, 127
    %v584 = vpop.permute.xlu0 %583
    %585 = vrot.lane.b32.xlu0 %v541, 127
    %v586 = vpop.permute.xlu0 %585
    %587 = vrot.lane.b32.xlu0 %v542, 127
    %v588 = vpop.permute.xlu0 %587
    %589 = vrot.lane.b32.xlu0 %v543, 127
    %v590 = vpop.permute.xlu0 %589
    %591 = vrot.lane.b32.xlu0 %v544, 127
    %v592 = vpop.permute.xlu0 %591
    %609 = vrot.lane.b32.xlu0 %v529, 1
    %v610 = vpop.permute.xlu0 %609
    %611 = vrot.lane.b32.xlu0 %v530, 1
    %v612 = vpop.permute.xlu0 %611
    %613 = vrot.lane.b32.xlu0 %v531, 1
    %v614 = vpop.permute.xlu0 %613
    %615 = vrot.lane.b32.xlu0 %v532, 1
    %v616 = vpop.permute.xlu0 %615
    %617 = vrot.lane.b32.xlu0 %v533, 1
    %v618 = vpop.permute.xlu0 %617
    %619 = vrot.lane.b32.xlu0 %v534, 1
    %v620 = vpop.permute.xlu0 %619
    %621 = vrot.lane.b32.xlu0 %v535, 1
    %v622 = vpop.permute.xlu0 %621
    %623 = vrot.lane.b32.xlu0 %v536, 1
    %v624 = vpop.permute.xlu0 %623
    %625 = vrot.lane.b32.xlu0 %v537, 1
    %v626 = vpop.permute.xlu0 %625
    %627 = vrot.lane.b32.xlu0 %v538, 1
    %v628 = vpop.permute.xlu0 %627
    %629 = vrot.lane.b32.xlu0 %v539, 1
    %v630 = vpop.permute.xlu0 %629
    %631 = vrot.lane.b32.xlu0 %v540, 1
    %v632 = vpop.permute.xlu0 %631
    %633 = vrot.lane.b32.xlu0 %v541, 1
    %v634 = vpop.permute.xlu0 %633
    %635 = vrot.lane.b32.xlu0 %v542, 1
    %v636 = vpop.permute.xlu0 %635
    %637 = vrot.lane.b32.xlu0 %v543, 1
    %v638 = vpop.permute.xlu0 %637
    %639 = vrot.lane.b32.xlu0 %v544, 1
    %v640 = vpop.permute.xlu0 %639
    %657 = vrot.lane.b32.xlu0 %v529, 3
    %v658 = vpop.permute.xlu0 %657
    %659 = vrot.lane.b32.xlu0 %v530, 3
    %v660 = vpop.permute.xlu0 %659
    %661 = vrot.lane.b32.xlu0 %v531, 3
    %v662 = vpop.permute.xlu0 %661
    %663 = vrot.lane.b32.xlu0 %v532, 3
    %v664 = vpop.permute.xlu0 %663
    %665 = vrot.lane.b32.xlu0 %v533, 3
    %v666 = vpop.permute.xlu0 %665
    %667 = vrot.lane.b32.xlu0 %v534, 3
    %v668 = vpop.permute.xlu0 %667
    %669 = vrot.lane.b32.xlu0 %v535, 3
    %v670 = vpop.permute.xlu0 %669
    %671 = vrot.lane.b32.xlu0 %v536, 3
    %v672 = vpop.permute.xlu0 %671
    %673 = vrot.lane.b32.xlu0 %v537, 3
    %v674 = vpop.permute.xlu0 %673
    %675 = vrot.lane.b32.xlu0 %v538, 3
    %v676 = vpop.permute.xlu0 %675
    %677 = vrot.lane.b32.xlu0 %v539, 3
    %v678 = vpop.permute.xlu0 %677
    %679 = vrot.lane.b32.xlu0 %v540, 3
    %v680 = vpop.permute.xlu0 %679
    %681 = vrot.lane.b32.xlu0 %v541, 3
    %v682 = vpop.permute.xlu0 %681
    %683 = vrot.lane.b32.xlu0 %v542, 3
    %v684 = vpop.permute.xlu0 %683
    %685 = vrot.lane.b32.xlu0 %v543, 3
    %v686 = vpop.permute.xlu0 %685
    %687 = vrot.lane.b32.xlu0 %v544, 3
    %v688 = vpop.permute.xlu0 %687
    %v705 = vsel %vm236, %v562, %v610
    %v706 = vsel %vm236, %v564, %v612
    %v707 = vsel %vm236, %v566, %v614
    %v708 = vsel %vm236, %v568, %v616
    %v709 = vsel %vm236, %v570, %v618
    %v710 = vsel %vm236, %v572, %v620
    %v711 = vsel %vm236, %v574, %v622
    %v712 = vsel %vm236, %v576, %v624
    %v713 = vsel %vm236, %v578, %v626
    %v714 = vsel %vm236, %v580, %v628
    %v715 = vsel %vm236, %v582, %v630
    %v716 = vsel %vm236, %v584, %v632
    %v717 = vsel %vm236, %v586, %v634
    %v718 = vsel %vm236, %v588, %v636
    %v719 = vsel %vm236, %v590, %v638
    %v720 = vsel %vm236, %v592, %v640
    %v721 = vsel %vm253, %v705, %v658
    %v722 = vsel %vm253, %v706, %v660
    %v723 = vsel %vm253, %v707, %v662
    %v724 = vsel %vm253, %v708, %v664
    %v725 = vsel %vm253, %v709, %v666
    %v726 = vsel %vm253, %v710, %v668
    %v727 = vsel %vm253, %v711, %v670
    %v728 = vsel %vm253, %v712, %v672
    %v729 = vsel %vm253, %v713, %v674
    %v730 = vsel %vm253, %v714, %v676
    %v731 = vsel %vm253, %v715, %v678
    %v732 = vsel %vm253, %v716, %v680
    %v733 = vsel %vm253, %v717, %v682
    %v734 = vsel %vm253, %v718, %v684
    %v735 = vsel %vm253, %v719, %v686
    %v736 = vsel %vm253, %v720, %v688
    %737 = vst.msk [vmem:[#allocation4 + $0x1] sm:$0xff] %vm270, %v721
    %738 = vst.msk [vmem:[#allocation4 + $0x9] sm:$0xff] %vm270, %v722
    %739 = vst.msk [vmem:[#allocation4 + $0x19] sm:$0xff] %vm270, %v723
    %740 = vst.msk [vmem:[#allocation4 + $0x21] sm:$0xff] %vm270, %v724
    %741 = vst.msk [vmem:[#allocation4 + $0x31] sm:$0xff] %vm270, %v725
    %742 = vst.msk [vmem:[#allocation4 + $0x39] sm:$0xff] %vm270, %v726
    %743 = vst.msk [vmem:[#allocation4 + $0x49] sm:$0xff] %vm270, %v727
    %744 = vst.msk [vmem:[#allocation4 + $0x51] sm:$0xff] %vm270, %v728
    %745 = vst.msk [vmem:[#allocation4 + $0x61] sm:$0xff] %vm270, %v729
    %746 = vst.msk [vmem:[#allocation4 + $0x69] sm:$0xff] %vm270, %v730
    %747 = vst.msk [vmem:[#allocation4 + $0x79] sm:$0xff] %vm270, %v731
    %748 = vst.msk [vmem:[#allocation4 + $0x81] sm:$0xff] %vm270, %v732
    %749 = vst.msk [vmem:[#allocation4 + $0x91] sm:$0xff] %vm270, %v733
    %750 = vst.msk [vmem:[#allocation4 + $0x99] sm:$0xff] %vm270, %v734
    %751 = vst.msk [vmem:[#allocation4 + $0xa9] sm:$0xff] %vm270, %v735
    %752 = vst.msk [vmem:[#allocation4 + $0xb1] sm:$0xff] %vm270, %v736
    %753 = vst.msk [vmem:[#allocation4 - $0x1] sm:$0x2] %vm287, %v721
    %754 = vst.msk [vmem:[#allocation4 + $0x17] sm:$0x2] %vm287, %v723
    %755 = vst.msk [vmem:[#allocation4 + $0x2f] sm:$0x2] %vm287, %v725
    %756 = vst.msk [vmem:[#allocation4 + $0x47] sm:$0x2] %vm287, %v727
    %757 = vst.msk [vmem:[#allocation4 + $0x5f] sm:$0x2] %vm287, %v729
    %758 = vst.msk [vmem:[#allocation4 + $0x77] sm:$0x2] %vm287, %v731
    %759 = vst.msk [vmem:[#allocation4 + $0x8f] sm:$0x2] %vm287, %v733
    %760 = vst.msk [vmem:[#allocation4 + $0xa7] sm:$0x2] %vm287, %v735
    %761 = vst.msk [vmem:[#allocation4 + $0xb] sm:$0x40] %vm296, %v722
    %762 = vst.msk [vmem:[#allocation4 + $0x23] sm:$0x40] %vm296, %v724
    %763 = vst.msk [vmem:[#allocation4 + $0x3b] sm:$0x40] %vm296, %v726
    %764 = vst.msk [vmem:[#allocation4 + $0x53] sm:$0x40] %vm296, %v728
    %765 = vst.msk [vmem:[#allocation4 + $0x6b] sm:$0x40] %vm296, %v730
    %766 = vst.msk [vmem:[#allocation4 + $0x83] sm:$0x40] %vm296, %v732
    %767 = vst.msk [vmem:[#allocation4 + $0x9b] sm:$0x40] %vm296, %v734
    %768 = vst.msk [vmem:[#allocation4 + $0xb3] sm:$0x40] %vm296, %v736
    %v769 = vmul.f32 %v60, %v60
    %v770 = vmul.f32 %v61, %v61
    %v771 = vmul.f32 %v62, %v62
    %v772 = vmul.f32 %v63, %v63
    %v773 = vmul.f32 %v64, %v64
    %v774 = vmul.f32 %v65, %v65
    %v775 = vmul.f32 %v66, %v66
    %v776 = vmul.f32 %v67, %v67
    %v777 = vmul.f32 %v68, %v68
    %v778 = vmul.f32 %v69, %v69
    %v779 = vmul.f32 %v70, %v70
    %v780 = vmul.f32 %v71, %v71
    %v781 = vmul.f32 %v72, %v72
    %v782 = vmul.f32 %v73, %v73
    %v783 = vmul.f32 %v74, %v74
    %v784 = vmul.f32 %v75, %v75
    %801 = vrot.lane.b32.xlu0 %v769, 127
    %v802 = vpop.permute.xlu0 %801
    %803 = vrot.lane.b32.xlu0 %v770, 127
    %v804 = vpop.permute.xlu0 %803
    %805 = vrot.lane.b32.xlu0 %v771, 127
    %v806 = vpop.permute.xlu0 %805
    %807 = vrot.lane.b32.xlu0 %v772, 127
    %v808 = vpop.permute.xlu0 %807
    %809 = vrot.lane.b32.xlu0 %v773, 127
    %v810 = vpop.permute.xlu0 %809
    %811 = vrot.lane.b32.xlu0 %v774, 127
    %v812 = vpop.permute.xlu0 %811
    %813 = vrot.lane.b32.xlu0 %v775, 127
    %v814 = vpop.permute.xlu0 %813
    %815 = vrot.lane.b32.xlu0 %v776, 127
    %v816 = vpop.permute.xlu0 %815
    %817 = vrot.lane.b32.xlu0 %v777, 127
    %v818 = vpop.permute.xlu0 %817
    %819 = vrot.lane.b32.xlu0 %v778, 127
    %v820 = vpop.permute.xlu0 %819
    %821 = vrot.lane.b32.xlu0 %v779, 127
    %v822 = vpop.permute.xlu0 %821
    %823 = vrot.lane.b32.xlu0 %v780, 127
    %v824 = vpop.permute.xlu0 %823
    %825 = vrot.lane.b32.xlu0 %v781, 127
    %v826 = vpop.permute.xlu0 %825
    %827 = vrot.lane.b32.xlu0 %v782, 127
    %v828 = vpop.permute.xlu0 %827
    %829 = vrot.lane.b32.xlu0 %v783, 127
    %v830 = vpop.permute.xlu0 %829
    %831 = vrot.lane.b32.xlu0 %v784, 127
    %v832 = vpop.permute.xlu0 %831
    %849 = vrot.lane.b32.xlu0 %v769, 1
    %v850 = vpop.permute.xlu0 %849
    %851 = vrot.lane.b32.xlu0 %v770, 1
    %v852 = vpop.permute.xlu0 %851
    %853 = vrot.lane.b32.xlu0 %v771, 1
    %v854 = vpop.permute.xlu0 %853
    %855 = vrot.lane.b32.xlu0 %v772, 1
    %v856 = vpop.permute.xlu0 %855
    %857 = vrot.lane.b32.xlu0 %v773, 1
    %v858 = vpop.permute.xlu0 %857
    %859 = vrot.lane.b32.xlu0 %v774, 1
    %v860 = vpop.permute.xlu0 %859
    %861 = vrot.lane.b32.xlu0 %v775, 1
    %v862 = vpop.permute.xlu0 %861
    %863 = vrot.lane.b32.xlu0 %v776, 1
    %v864 = vpop.permute.xlu0 %863
    %865 = vrot.lane.b32.xlu0 %v777, 1
    %v866 = vpop.permute.xlu0 %865
    %867 = vrot.lane.b32.xlu0 %v778, 1
    %v868 = vpop.permute.xlu0 %867
    %869 = vrot.lane.b32.xlu0 %v779, 1
    %v870 = vpop.permute.xlu0 %869
    %871 = vrot.lane.b32.xlu0 %v780, 1
    %v872 = vpop.permute.xlu0 %871
    %873 = vrot.lane.b32.xlu0 %v781, 1
    %v874 = vpop.permute.xlu0 %873
    %875 = vrot.lane.b32.xlu0 %v782, 1
    %v876 = vpop.permute.xlu0 %875
    %877 = vrot.lane.b32.xlu0 %v783, 1
    %v878 = vpop.permute.xlu0 %877
    %879 = vrot.lane.b32.xlu0 %v784, 1
    %v880 = vpop.permute.xlu0 %879
    %897 = vrot.lane.b32.xlu0 %v769, 3
    %v898 = vpop.permute.xlu0 %897
    %899 = vrot.lane.b32.xlu0 %v770, 3
    %v900 = vpop.permute.xlu0 %899
    %901 = vrot.lane.b32.xlu0 %v771, 3
    %v902 = vpop.permute.xlu0 %901
    %903 = vrot.lane.b32.xlu0 %v772, 3
    %v904 = vpop.permute.xlu0 %903
    %905 = vrot.lane.b32.xlu0 %v773, 3
    %v906 = vpop.permute.xlu0 %905
    %907 = vrot.lane.b32.xlu0 %v774, 3
    %v908 = vpop.permute.xlu0 %907
    %909 = vrot.lane.b32.xlu0 %v775, 3
    %v910 = vpop.permute.xlu0 %909
    %911 = vrot.lane.b32.xlu0 %v776, 3
    %v912 = vpop.permute.xlu0 %911
    %913 = vrot.lane.b32.xlu0 %v777, 3
    %v914 = vpop.permute.xlu0 %913
    %915 = vrot.lane.b32.xlu0 %v778, 3
    %v916 = vpop.permute.xlu0 %915
    %917 = vrot.lane.b32.xlu0 %v779, 3
    %v918 = vpop.permute.xlu0 %917
    %919 = vrot.lane.b32.xlu0 %v780, 3
    %v920 = vpop.permute.xlu0 %919
    %921 = vrot.lane.b32.xlu0 %v781, 3
    %v922 = vpop.permute.xlu0 %921
    %923 = vrot.lane.b32.xlu0 %v782, 3
    %v924 = vpop.permute.xlu0 %923
    %925 = vrot.lane.b32.xlu0 %v783, 3
    %v926 = vpop.permute.xlu0 %925
    %927 = vrot.lane.b32.xlu0 %v784, 3
    %v928 = vpop.permute.xlu0 %927
    %v945 = vsel %vm236, %v802, %v850
    %v946 = vsel %vm236, %v804, %v852
    %v947 = vsel %vm236, %v806, %v854
    %v948 = vsel %vm236, %v808, %v856
    %v949 = vsel %vm236, %v810, %v858
    %v950 = vsel %vm236, %v812, %v860
    %v951 = vsel %vm236, %v814, %v862
    %v952 = vsel %vm236, %v816, %v864
    %v953 = vsel %vm236, %v818, %v866
    %v954 = vsel %vm236, %v820, %v868
    %v955 = vsel %vm236, %v822, %v870
    %v956 = vsel %vm236, %v824, %v872
    %v957 = vsel %vm236, %v826, %v874
    %v958 = vsel %vm236, %v828, %v876
    %v959 = vsel %vm236, %v830, %v878
    %v960 = vsel %vm236, %v832, %v880
    %v961 = vsel %vm253, %v945, %v898
    %v962 = vsel %vm253, %v946, %v900
    %v963 = vsel %vm253, %v947, %v902
    %v964 = vsel %vm253, %v948, %v904
    %v965 = vsel %vm253, %v949, %v906
    %v966 = vsel %vm253, %v950, %v908
    %v967 = vsel %vm253, %v951, %v910
    %v968 = vsel %vm253, %v952, %v912
    %v969 = vsel %vm253, %v953, %v914
    %v970 = vsel %vm253, %v954, %v916
    %v971 = vsel %vm253, %v955, %v918
    %v972 = vsel %vm253, %v956, %v920
    %v973 = vsel %vm253, %v957, %v922
    %v974 = vsel %vm253, %v958, %v924
    %v975 = vsel %vm253, %v959, %v926
    %v976 = vsel %vm253, %v960, %v928
    %977 = vst.msk [vmem:[#allocation5 + $0x1] sm:$0xff] %vm270, %v961
    %978 = vst.msk [vmem:[#allocation5 + $0x9] sm:$0xff] %vm270, %v962
    %979 = vst.msk [vmem:[#allocation5 + $0x19] sm:$0xff] %vm270, %v963
    %980 = vst.msk [vmem:[#allocation5 + $0x21] sm:$0xff] %vm270, %v964
    %981 = vst.msk [vmem:[#allocation5 + $0x31] sm:$0xff] %vm270, %v965
    %982 = vst.msk [vmem:[#allocation5 + $0x39] sm:$0xff] %vm270, %v966
    %983 = vst.msk [vmem:[#allocation5 + $0x49] sm:$0xff] %vm270, %v967
    %984 = vst.msk [vmem:[#allocation5 + $0x51] sm:$0xff] %vm270, %v968
    %985 = vst.msk [vmem:[#allocation5 + $0x61] sm:$0xff] %vm270, %v969
    %986 = vst.msk [vmem:[#allocation5 + $0x69] sm:$0xff] %vm270, %v970
    %987 = vst.msk [vmem:[#allocation5 + $0x79] sm:$0xff] %vm270, %v971
    %988 = vst.msk [vmem:[#allocation5 + $0x81] sm:$0xff] %vm270, %v972
    %989 = vst.msk [vmem:[#allocation5 + $0x91] sm:$0xff] %vm270, %v973
    %990 = vst.msk [vmem:[#allocation5 + $0x99] sm:$0xff] %vm270, %v974
    %991 = vst.msk [vmem:[#allocation5 + $0xa9] sm:$0xff] %vm270, %v975
    %992 = vst.msk [vmem:[#allocation5 + $0xb1] sm:$0xff] %vm270, %v976
    %993 = vst.msk [vmem:[#allocation5 - $0x1] sm:$0x2] %vm287, %v961
    %994 = vst.msk [vmem:[#allocation5 + $0x17] sm:$0x2] %vm287, %v963
    %995 = vst.msk [vmem:[#allocation5 + $0x2f] sm:$0x2] %vm287, %v965
    %996 = vst.msk [vmem:[#allocation5 + $0x47] sm:$0x2] %vm287, %v967
    %997 = vst.msk [vmem:[#allocation5 + $0x5f] sm:$0x2] %vm287, %v969
    %998 = vst.msk [vmem:[#allocation5 + $0x77] sm:$0x2] %vm287, %v971
    %999 = vst.msk [vmem:[#allocation5 + $0x8f] sm:$0x2] %vm287, %v973
    %1000 = vst.msk [vmem:[#allocation5 + $0xa7] sm:$0x2] %vm287, %v975
    %1001 = vst.msk [vmem:[#allocation5 + $0xb] sm:$0x40] %vm296, %v962
    %1002 = vst.msk [vmem:[#allocation5 + $0x23] sm:$0x40] %vm296, %v964
    %1003 = vst.msk [vmem:[#allocation5 + $0x3b] sm:$0x40] %vm296, %v966
    %1004 = vst.msk [vmem:[#allocation5 + $0x53] sm:$0x40] %vm296, %v968
    %1005 = vst.msk [vmem:[#allocation5 + $0x6b] sm:$0x40] %vm296, %v970
    %1006 = vst.msk [vmem:[#allocation5 + $0x83] sm:$0x40] %vm296, %v972
    %1007 = vst.msk [vmem:[#allocation5 + $0x9b] sm:$0x40] %vm296, %v974
    %1008 = vst.msk [vmem:[#allocation5 + $0xb3] sm:$0x40] %vm296, %v976
    %v1009 = vmul.f32 %v44, %v60
    %v1010 = vmul.f32 %v45, %v61
    %v1011 = vmul.f32 %v46, %v62
    %v1012 = vmul.f32 %v47, %v63
    %v1013 = vmul.f32 %v48, %v64
    %v1014 = vmul.f32 %v49, %v65
    %v1015 = vmul.f32 %v50, %v66
    %v1016 = vmul.f32 %v51, %v67
    %v1017 = vmul.f32 %v52, %v68
    %v1018 = vmul.f32 %v53, %v69
    %v1019 = vmul.f32 %v54, %v70
    %v1020 = vmul.f32 %v55, %v71
    %v1021 = vmul.f32 %v56, %v72
    %v1022 = vmul.f32 %v57, %v73
    %v1023 = vmul.f32 %v58, %v74
    %v1024 = vmul.f32 %v59, %v75
    %1041 = vrot.lane.b32.xlu0 %v1009, 127
    %v1042 = vpop.permute.xlu0 %1041
    %1043 = vrot.lane.b32.xlu0 %v1010, 127
    %v1044 = vpop.permute.xlu0 %1043
    %1045 = vrot.lane.b32.xlu0 %v1011, 127
    %v1046 = vpop.permute.xlu0 %1045
    %1047 = vrot.lane.b32.xlu0 %v1012, 127
    %v1048 = vpop.permute.xlu0 %1047
    %1049 = vrot.lane.b32.xlu0 %v1013, 127
    %v1050 = vpop.permute.xlu0 %1049
    %1051 = vrot.lane.b32.xlu0 %v1014, 127
    %v1052 = vpop.permute.xlu0 %1051
    %1053 = vrot.lane.b32.xlu0 %v1015, 127
    %v1054 = vpop.permute.xlu0 %1053
    %1055 = vrot.lane.b32.xlu0 %v1016, 127
    %v1056 = vpop.permute.xlu0 %1055
    %1057 = vrot.lane.b32.xlu0 %v1017, 127
    %v1058 = vpop.permute.xlu0 %1057
    %1059 = vrot.lane.b32.xlu0 %v1018, 127
    %v1060 = vpop.permute.xlu0 %1059
    %1061 = vrot.lane.b32.xlu0 %v1019, 127
    %v1062 = vpop.permute.xlu0 %1061
    %1063 = vrot.lane.b32.xlu0 %v1020, 127
    %v1064 = vpop.permute.xlu0 %1063
    %1065 = vrot.lane.b32.xlu0 %v1021, 127
    %v1066 = vpop.permute.xlu0 %1065
    %1067 = vrot.lane.b32.xlu0 %v1022, 127
    %v1068 = vpop.permute.xlu0 %1067
    %1069 = vrot.lane.b32.xlu0 %v1023, 127
    %v1070 = vpop.permute.xlu0 %1069
    %1071 = vrot.lane.b32.xlu0 %v1024, 127
    %v1072 = vpop.permute.xlu0 %1071
    %1089 = vrot.lane.b32.xlu0 %v1009, 1
    %v1090 = vpop.permute.xlu0 %1089
    %1091 = vrot.lane.b32.xlu0 %v1010, 1
    %v1092 = vpop.permute.xlu0 %1091
    %1093 = vrot.lane.b32.xlu0 %v1011, 1
    %v1094 = vpop.permute.xlu0 %1093
    %1095 = vrot.lane.b32.xlu0 %v1012, 1
    %v1096 = vpop.permute.xlu0 %1095
    %1097 = vrot.lane.b32.xlu0 %v1013, 1
    %v1098 = vpop.permute.xlu0 %1097
    %1099 = vrot.lane.b32.xlu0 %v1014, 1
    %v1100 = vpop.permute.xlu0 %1099
    %1101 = vrot.lane.b32.xlu0 %v1015, 1
    %v1102 = vpop.permute.xlu0 %1101
    %1103 = vrot.lane.b32.xlu0 %v1016, 1
    %v1104 = vpop.permute.xlu0 %1103
    %1105 = vrot.lane.b32.xlu0 %v1017, 1
    %v1106 = vpop.permute.xlu0 %1105
    %1107 = vrot.lane.b32.xlu0 %v1018, 1
    %v1108 = vpop.permute.xlu0 %1107
    %1109 = vrot.lane.b32.xlu0 %v1019, 1
    %v1110 = vpop.permute.xlu0 %1109
    %1111 = vrot.lane.b32.xlu0 %v1020, 1
    %v1112 = vpop.permute.xlu0 %1111
    %1113 = vrot.lane.b32.xlu0 %v1021, 1
    %v1114 = vpop.permute.xlu0 %1113
    %1115 = vrot.lane.b32.xlu0 %v1022, 1
    %v1116 = vpop.permute.xlu0 %1115
    %1117 = vrot.lane.b32.xlu0 %v1023, 1
    %v1118 = vpop.permute.xlu0 %1117
    %1119 = vrot.lane.b32.xlu0 %v1024, 1
    %v1120 = vpop.permute.xlu0 %1119
    %1137 = vrot.lane.b32.xlu0 %v1009, 3
    %v1138 = vpop.permute.xlu0 %1137
    %1139 = vrot.lane.b32.xlu0 %v1010, 3
    %v1140 = vpop.permute.xlu0 %1139
    %1141 = vrot.lane.b32.xlu0 %v1011, 3
    %v1142 = vpop.permute.xlu0 %1141
    %1143 = vrot.lane.b32.xlu0 %v1012, 3
    %v1144 = vpop.permute.xlu0 %1143
    %1145 = vrot.lane.b32.xlu0 %v1013, 3
    %v1146 = vpop.permute.xlu0 %1145
    %1147 = vrot.lane.b32.xlu0 %v1014, 3
    %v1148 = vpop.permute.xlu0 %1147
    %1149 = vrot.lane.b32.xlu0 %v1015, 3
    %v1150 = vpop.permute.xlu0 %1149
    %1151 = vrot.lane.b32.xlu0 %v1016, 3
    %v1152 = vpop.permute.xlu0 %1151
    %1153 = vrot.lane.b32.xlu0 %v1017, 3
    %v1154 = vpop.permute.xlu0 %1153
    %1155 = vrot.lane.b32.xlu0 %v1018, 3
    %v1156 = vpop.permute.xlu0 %1155
    %1157 = vrot.lane.b32.xlu0 %v1019, 3
    %v1158 = vpop.permute.xlu0 %1157
    %1159 = vrot.lane.b32.xlu0 %v1020, 3
    %v1160 = vpop.permute.xlu0 %1159
    %1161 = vrot.lane.b32.xlu0 %v1021, 3
    %v1162 = vpop.permute.xlu0 %1161
    %1163 = vrot.lane.b32.xlu0 %v1022, 3
    %v1164 = vpop.permute.xlu0 %1163
    %1165 = vrot.lane.b32.xlu0 %v1023, 3
    %v1166 = vpop.permute.xlu0 %1165
    %1167 = vrot.lane.b32.xlu0 %v1024, 3
    %v1168 = vpop.permute.xlu0 %1167
    %v1185 = vsel %vm236, %v1042, %v1090
    %v1186 = vsel %vm236, %v1044, %v1092
    %v1187 = vsel %vm236, %v1046, %v1094
    %v1188 = vsel %vm236, %v1048, %v1096
    %v1189 = vsel %vm236, %v1050, %v1098
    %v1190 = vsel %vm236, %v1052, %v1100
    %v1191 = vsel %vm236, %v1054, %v1102
    %v1192 = vsel %vm236, %v1056, %v1104
    %v1193 = vsel %vm236, %v1058, %v1106
    %v1194 = vsel %vm236, %v1060, %v1108
    %v1195 = vsel %vm236, %v1062, %v1110
    %v1196 = vsel %vm236, %v1064, %v1112
    %v1197 = vsel %vm236, %v1066, %v1114
    %v1198 = vsel %vm236, %v1068, %v1116
    %v1199 = vsel %vm236, %v1070, %v1118
    %v1200 = vsel %vm236, %v1072, %v1120
    %v1201 = vsel %vm253, %v1185, %v1138
    %v1202 = vsel %vm253, %v1186, %v1140
    %v1203 = vsel %vm253, %v1187, %v1142
    %v1204 = vsel %vm253, %v1188, %v1144
    %v1205 = vsel %vm253, %v1189, %v1146
    %v1206 = vsel %vm253, %v1190, %v1148
    %v1207 = vsel %vm253, %v1191, %v1150
    %v1208 = vsel %vm253, %v1192, %v1152
    %v1209 = vsel %vm253, %v1193, %v1154
    %v1210 = vsel %vm253, %v1194, %v1156
    %v1211 = vsel %vm253, %v1195, %v1158
    %v1212 = vsel %vm253, %v1196, %v1160
    %v1213 = vsel %vm253, %v1197, %v1162
    %v1214 = vsel %vm253, %v1198, %v1164
    %v1215 = vsel %vm253, %v1199, %v1166
    %v1216 = vsel %vm253, %v1200, %v1168
    %1217 = vst.msk [vmem:[#allocation6 + $0x1] sm:$0xff] %vm270, %v1201
    %1218 = vst.msk [vmem:[#allocation6 + $0x9] sm:$0xff] %vm270, %v1202
    %1219 = vst.msk [vmem:[#allocation6 + $0x19] sm:$0xff] %vm270, %v1203
    %1220 = vst.msk [vmem:[#allocation6 + $0x21] sm:$0xff] %vm270, %v1204
    %1221 = vst.msk [vmem:[#allocation6 + $0x31] sm:$0xff] %vm270, %v1205
    %1222 = vst.msk [vmem:[#allocation6 + $0x39] sm:$0xff] %vm270, %v1206
    %1223 = vst.msk [vmem:[#allocation6 + $0x49] sm:$0xff] %vm270, %v1207
    %1224 = vst.msk [vmem:[#allocation6 + $0x51] sm:$0xff] %vm270, %v1208
    %1225 = vst.msk [vmem:[#allocation6 + $0x61] sm:$0xff] %vm270, %v1209
    %1226 = vst.msk [vmem:[#allocation6 + $0x69] sm:$0xff] %vm270, %v1210
    %1227 = vst.msk [vmem:[#allocation6 + $0x79] sm:$0xff] %vm270, %v1211
    %1228 = vst.msk [vmem:[#allocation6 + $0x81] sm:$0xff] %vm270, %v1212
    %1229 = vst.msk [vmem:[#allocation6 + $0x91] sm:$0xff] %vm270, %v1213
    %1230 = vst.msk [vmem:[#allocation6 + $0x99] sm:$0xff] %vm270, %v1214
    %1231 = vst.msk [vmem:[#allocation6 + $0xa9] sm:$0xff] %vm270, %v1215
    %1232 = vst.msk [vmem:[#allocation6 + $0xb1] sm:$0xff] %vm270, %v1216
    %1233 = vst.msk [vmem:[#allocation6 - $0x1] sm:$0x2] %vm287, %v1201
    %1234 = vst.msk [vmem:[#allocation6 + $0x17] sm:$0x2] %vm287, %v1203
    %1235 = vst.msk [vmem:[#allocation6 + $0x2f] sm:$0x2] %vm287, %v1205
    %1236 = vst.msk [vmem:[#allocation6 + $0x47] sm:$0x2] %vm287, %v1207
    %1237 = vst.msk [vmem:[#allocation6 + $0x5f] sm:$0x2] %vm287, %v1209
    %1238 = vst.msk [vmem:[#allocation6 + $0x77] sm:$0x2] %vm287, %v1211
    %1239 = vst.msk [vmem:[#allocation6 + $0x8f] sm:$0x2] %vm287, %v1213
    %1240 = vst.msk [vmem:[#allocation6 + $0xa7] sm:$0x2] %vm287, %v1215
    %1241 = vst.msk [vmem:[#allocation6 + $0xb] sm:$0x40] %vm296, %v1202
    %1242 = vst.msk [vmem:[#allocation6 + $0x23] sm:$0x40] %vm296, %v1204
    %1243 = vst.msk [vmem:[#allocation6 + $0x3b] sm:$0x40] %vm296, %v1206
    %1244 = vst.msk [vmem:[#allocation6 + $0x53] sm:$0x40] %vm296, %v1208
    %1245 = vst.msk [vmem:[#allocation6 + $0x6b] sm:$0x40] %vm296, %v1210
    %1246 = vst.msk [vmem:[#allocation6 + $0x83] sm:$0x40] %vm296, %v1212
    %1247 = vst.msk [vmem:[#allocation6 + $0x9b] sm:$0x40] %vm296, %v1214
    %1248 = vst.msk [vmem:[#allocation6 + $0xb3] sm:$0x40] %vm296, %v1216
    %v1249 = vld [vmem:[#allocation2] sm:$0xff]
    %v1250 = vld [vmem:[#allocation2 + $0x8] sm:$0xff]
    %v1251 = vld [vmem:[#allocation2 + $0x18] sm:$0xff]
    %v1252 = vld [vmem:[#allocation2 + $0x20] sm:$0xff]
    %v1253 = vld [vmem:[#allocation2 + $0x30] sm:$0xff]
    %v1254 = vld [vmem:[#allocation2 + $0x38] sm:$0xff]
    %v1255 = vld [vmem:[#allocation2 + $0x48] sm:$0xff]
    %v1256 = vld [vmem:[#allocation2 + $0x50] sm:$0xff]
    %v1257 = vld [vmem:[#allocation2 + $0x60] sm:$0xff]
    %v1258 = vld [vmem:[#allocation2 + $0x68] sm:$0xff]
    %v1259 = vld [vmem:[#allocation2 + $0x78] sm:$0xff]
    %v1260 = vld [vmem:[#allocation2 + $0x80] sm:$0xff]
    %v1261 = vld [vmem:[#allocation2 + $0x90] sm:$0xff]
    %v1262 = vld [vmem:[#allocation2 + $0x98] sm:$0xff]
    %v1263 = vld [vmem:[#allocation2 + $0xa8] sm:$0xff]
    %v1264 = vld [vmem:[#allocation2 + $0xb0] sm:$0xff]
    %v1265 = vld [vmem:[#allocation2 + $0x1] sm:$0xff]
    %v1266 = vld [vmem:[#allocation2 + $0x9] sm:$0xff]
    %v1267 = vld [vmem:[#allocation2 + $0x19] sm:$0xff]
    %v1268 = vld [vmem:[#allocation2 + $0x21] sm:$0xff]
    %v1269 = vld [vmem:[#allocation2 + $0x31] sm:$0xff]
    %v1270 = vld [vmem:[#allocation2 + $0x39] sm:$0xff]
    %v1271 = vld [vmem:[#allocation2 + $0x49] sm:$0xff]
    %v1272 = vld [vmem:[#allocation2 + $0x51] sm:$0xff]
    %v1273 = vld [vmem:[#allocation2 + $0x61] sm:$0xff]
    %v1274 = vld [vmem:[#allocation2 + $0x69] sm:$0xff]
    %v1275 = vld [vmem:[#allocation2 + $0x79] sm:$0xff]
    %v1276 = vld [vmem:[#allocation2 + $0x81] sm:$0xff]
    %v1277 = vld [vmem:[#allocation2 + $0x91] sm:$0xff]
    %v1278 = vld [vmem:[#allocation2 + $0x99] sm:$0xff]
    %v1279 = vld [vmem:[#allocation2 + $0xa9] sm:$0xff]
    %v1280 = vld [vmem:[#allocation2 + $0xb1] sm:$0xff]
    %v1281 = vadd.f32 %v1249, %v1265
    %v1282 = vadd.f32 %v1250, %v1266
    %v1283 = vadd.f32 %v1251, %v1267
    %v1284 = vadd.f32 %v1252, %v1268
    %v1285 = vadd.f32 %v1253, %v1269
    %v1286 = vadd.f32 %v1254, %v1270
    %v1287 = vadd.f32 %v1255, %v1271
    %v1288 = vadd.f32 %v1256, %v1272
    %v1289 = vadd.f32 %v1257, %v1273
    %v1290 = vadd.f32 %v1258, %v1274
    %v1291 = vadd.f32 %v1259, %v1275
    %v1292 = vadd.f32 %v1260, %v1276
    %v1293 = vadd.f32 %v1261, %v1277
    %v1294 = vadd.f32 %v1262, %v1278
    %v1295 = vadd.f32 %v1263, %v1279
    %v1296 = vadd.f32 %v1264, %v1280
    %v1297 = vld [vmem:[#allocation2 + $0x2] sm:$0xff]
    %v1298 = vld [vmem:[#allocation2 + $0xa] sm:$0xff]
    %v1299 = vld [vmem:[#allocation2 + $0x1a] sm:$0xff]
    %v1300 = vld [vmem:[#allocation2 + $0x22] sm:$0xff]
    %v1301 = vld [vmem:[#allocation2 + $0x32] sm:$0xff]
    %v1302 = vld [vmem:[#allocation2 + $0x3a] sm:$0xff]
    %v1303 = vld [vmem:[#allocation2 + $0x4a] sm:$0xff]
    %v1304 = vld [vmem:[#allocation2 + $0x52] sm:$0xff]
    %v1305 = vld [vmem:[#allocation2 + $0x62] sm:$0xff]
    %v1306 = vld [vmem:[#allocation2 + $0x6a] sm:$0xff]
    %v1307 = vld [vmem:[#allocation2 + $0x7a] sm:$0xff]
    %v1308 = vld [vmem:[#allocation2 + $0x82] sm:$0xff]
    %v1309 = vld [vmem:[#allocation2 + $0x92] sm:$0xff]
    %v1310 = vld [vmem:[#allocation2 + $0x9a] sm:$0xff]
    %v1311 = vld [vmem:[#allocation2 + $0xaa] sm:$0xff]
    %v1312 = vld [vmem:[#allocation2 + $0xb2] sm:$0xff]
    %v1313 = vadd.f32 %v1281, %v1297
    %v1314 = vadd.f32 %v1282, %v1298
    %v1315 = vadd.f32 %v1283, %v1299
    %v1316 = vadd.f32 %v1284, %v1300
    %v1317 = vadd.f32 %v1285, %v1301
    %v1318 = vadd.f32 %v1286, %v1302
    %v1319 = vadd.f32 %v1287, %v1303
    %v1320 = vadd.f32 %v1288, %v1304
    %v1321 = vadd.f32 %v1289, %v1305
    %v1322 = vadd.f32 %v1290, %v1306
    %v1323 = vadd.f32 %v1291, %v1307
    %v1324 = vadd.f32 %v1292, %v1308
    %v1325 = vadd.f32 %v1293, %v1309
    %v1326 = vadd.f32 %v1294, %v1310
    %v1327 = vadd.f32 %v1295, %v1311
    %v1328 = vadd.f32 %v1296, %v1312
    %1345 = vrot.lane.b32.xlu0 %v1313, 127
    %v1346 = vpop.permute.xlu0 %1345
    %1347 = vrot.lane.b32.xlu0 %v1314, 127
    %v1348 = vpop.permute.xlu0 %1347
    %1349 = vrot.lane.b32.xlu0 %v1315, 127
    %v1350 = vpop.permute.xlu0 %1349
    %1351 = vrot.lane.b32.xlu0 %v1316, 127
    %v1352 = vpop.permute.xlu0 %1351
    %1353 = vrot.lane.b32.xlu0 %v1317, 127
    %v1354 = vpop.permute.xlu0 %1353
    %1355 = vrot.lane.b32.xlu0 %v1318, 127
    %v1356 = vpop.permute.xlu0 %1355
    %1357 = vrot.lane.b32.xlu0 %v1319, 127
    %v1358 = vpop.permute.xlu0 %1357
    %1359 = vrot.lane.b32.xlu0 %v1320, 127
    %v1360 = vpop.permute.xlu0 %1359
    %1361 = vrot.lane.b32.xlu0 %v1321, 127
    %v1362 = vpop.permute.xlu0 %1361
    %1363 = vrot.lane.b32.xlu0 %v1322, 127
    %v1364 = vpop.permute.xlu0 %1363
    %1365 = vrot.lane.b32.xlu0 %v1323, 127
    %v1366 = vpop.permute.xlu0 %1365
    %1367 = vrot.lane.b32.xlu0 %v1324, 127
    %v1368 = vpop.permute.xlu0 %1367
    %1369 = vrot.lane.b32.xlu0 %v1325, 127
    %v1370 = vpop.permute.xlu0 %1369
    %1371 = vrot.lane.b32.xlu0 %v1326, 127
    %v1372 = vpop.permute.xlu0 %1371
    %1373 = vrot.lane.b32.xlu0 %v1327, 127
    %v1374 = vpop.permute.xlu0 %1373
    %1375 = vrot.lane.b32.xlu0 %v1328, 127
    %v1376 = vpop.permute.xlu0 %1375
    %v1393 = vadd.f32 %v1313, %v1346
    %v1394 = vadd.f32 %v1314, %v1348
    %v1395 = vadd.f32 %v1315, %v1350
    %v1396 = vadd.f32 %v1316, %v1352
    %v1397 = vadd.f32 %v1317, %v1354
    %v1398 = vadd.f32 %v1318, %v1356
    %v1399 = vadd.f32 %v1319, %v1358
    %v1400 = vadd.f32 %v1320, %v1360
    %v1401 = vadd.f32 %v1321, %v1362
    %v1402 = vadd.f32 %v1322, %v1364
    %v1403 = vadd.f32 %v1323, %v1366
    %v1404 = vadd.f32 %v1324, %v1368
    %v1405 = vadd.f32 %v1325, %v1370
    %v1406 = vadd.f32 %v1326, %v1372
    %v1407 = vadd.f32 %v1327, %v1374
    %v1408 = vadd.f32 %v1328, %v1376
    %1409 = vrot.lane.b32.xlu0 %v1313, 126
    %v1410 = vpop.permute.xlu0 %1409
    %1411 = vrot.lane.b32.xlu0 %v1314, 126
    %v1412 = vpop.permute.xlu0 %1411
    %1413 = vrot.lane.b32.xlu0 %v1315, 126
    %v1414 = vpop.permute.xlu0 %1413
    %1415 = vrot.lane.b32.xlu0 %v1316, 126
    %v1416 = vpop.permute.xlu0 %1415
    %1417 = vrot.lane.b32.xlu0 %v1317, 126
    %v1418 = vpop.permute.xlu0 %1417
    %1419 = vrot.lane.b32.xlu0 %v1318, 126
    %v1420 = vpop.permute.xlu0 %1419
    %1421 = vrot.lane.b32.xlu0 %v1319, 126
    %v1422 = vpop.permute.xlu0 %1421
    %1423 = vrot.lane.b32.xlu0 %v1320, 126
    %v1424 = vpop.permute.xlu0 %1423
    %1425 = vrot.lane.b32.xlu0 %v1321, 126
    %v1426 = vpop.permute.xlu0 %1425
    %1427 = vrot.lane.b32.xlu0 %v1322, 126
    %v1428 = vpop.permute.xlu0 %1427
    %1429 = vrot.lane.b32.xlu0 %v1323, 126
    %v1430 = vpop.permute.xlu0 %1429
    %1431 = vrot.lane.b32.xlu0 %v1324, 126
    %v1432 = vpop.permute.xlu0 %1431
    %1433 = vrot.lane.b32.xlu0 %v1325, 126
    %v1434 = vpop.permute.xlu0 %1433
    %1435 = vrot.lane.b32.xlu0 %v1326, 126
    %v1436 = vpop.permute.xlu0 %1435
    %1437 = vrot.lane.b32.xlu0 %v1327, 126
    %v1438 = vpop.permute.xlu0 %1437
    %1439 = vrot.lane.b32.xlu0 %v1328, 126
    %v1440 = vpop.permute.xlu0 %1439
    %v1457 = vadd.f32 %v1393, %v1410
    %v1458 = vadd.f32 %v1394, %v1412
    %v1459 = vadd.f32 %v1395, %v1414
    %v1460 = vadd.f32 %v1396, %v1416
    %v1461 = vadd.f32 %v1397, %v1418
    %v1462 = vadd.f32 %v1398, %v1420
    %v1463 = vadd.f32 %v1399, %v1422
    %v1464 = vadd.f32 %v1400, %v1424
    %v1465 = vadd.f32 %v1401, %v1426
    %v1466 = vadd.f32 %v1402, %v1428
    %v1467 = vadd.f32 %v1403, %v1430
    %v1468 = vadd.f32 %v1404, %v1432
    %v1469 = vadd.f32 %v1405, %v1434
    %v1470 = vadd.f32 %v1406, %v1436
    %v1471 = vadd.f32 %v1407, %v1438
    %v1472 = vadd.f32 %v1408, %v1440
    %v1473 = vld [vmem:[#allocation3] sm:$0xff]
    %v1474 = vld [vmem:[#allocation3 + $0x8] sm:$0xff]
    %v1475 = vld [vmem:[#allocation3 + $0x18] sm:$0xff]
    %v1476 = vld [vmem:[#allocation3 + $0x20] sm:$0xff]
    %v1477 = vld [vmem:[#allocation3 + $0x30] sm:$0xff]
    %v1478 = vld [vmem:[#allocation3 + $0x38] sm:$0xff]
    %v1479 = vld [vmem:[#allocation3 + $0x48] sm:$0xff]
    %v1480 = vld [vmem:[#allocation3 + $0x50] sm:$0xff]
    %v1481 = vld [vmem:[#allocation3 + $0x60] sm:$0xff]
    %v1482 = vld [vmem:[#allocation3 + $0x68] sm:$0xff]
    %v1483 = vld [vmem:[#allocation3 + $0x78] sm:$0xff]
    %v1484 = vld [vmem:[#allocation3 + $0x80] sm:$0xff]
    %v1485 = vld [vmem:[#allocation3 + $0x90] sm:$0xff]
    %v1486 = vld [vmem:[#allocation3 + $0x98] sm:$0xff]
    %v1487 = vld [vmem:[#allocation3 + $0xa8] sm:$0xff]
    %v1488 = vld [vmem:[#allocation3 + $0xb0] sm:$0xff]
    %v1489 = vld [vmem:[#allocation3 + $0x1] sm:$0xff]
    %v1490 = vld [vmem:[#allocation3 + $0x9] sm:$0xff]
    %v1491 = vld [vmem:[#allocation3 + $0x19] sm:$0xff]
    %v1492 = vld [vmem:[#allocation3 + $0x21] sm:$0xff]
    %v1493 = vld [vmem:[#allocation3 + $0x31] sm:$0xff]
    %v1494 = vld [vmem:[#allocation3 + $0x39] sm:$0xff]
    %v1495 = vld [vmem:[#allocation3 + $0x49] sm:$0xff]
    %v1496 = vld [vmem:[#allocation3 + $0x51] sm:$0xff]
    %v1497 = vld [vmem:[#allocation3 + $0x61] sm:$0xff]
    %v1498 = vld [vmem:[#allocation3 + $0x69] sm:$0xff]
    %v1499 = vld [vmem:[#allocation3 + $0x79] sm:$0xff]
    %v1500 = vld [vmem:[#allocation3 + $0x81] sm:$0xff]
    %v1501 = vld [vmem:[#allocation3 + $0x91] sm:$0xff]
    %v1502 = vld [vmem:[#allocation3 + $0x99] sm:$0xff]
    %v1503 = vld [vmem:[#allocation3 + $0xa9] sm:$0xff]
    %v1504 = vld [vmem:[#allocation3 + $0xb1] sm:$0xff]
    %v1505 = vadd.f32 %v1473, %v1489
    %v1506 = vadd.f32 %v1474, %v1490
    %v1507 = vadd.f32 %v1475, %v1491
    %v1508 = vadd.f32 %v1476, %v1492
    %v1509 = vadd.f32 %v1477, %v1493
    %v1510 = vadd.f32 %v1478, %v1494
    %v1511 = vadd.f32 %v1479, %v1495
    %v1512 = vadd.f32 %v1480, %v1496
    %v1513 = vadd.f32 %v1481, %v1497
    %v1514 = vadd.f32 %v1482, %v1498
    %v1515 = vadd.f32 %v1483, %v1499
    %v1516 = vadd.f32 %v1484, %v1500
    %v1517 = vadd.f32 %v1485, %v1501
    %v1518 = vadd.f32 %v1486, %v1502
    %v1519 = vadd.f32 %v1487, %v1503
    %v1520 = vadd.f32 %v1488, %v1504
    %v1521 = vld [vmem:[#allocation3 + $0x2] sm:$0xff]
    %v1522 = vld [vmem:[#allocation3 + $0xa] sm:$0xff]
    %v1523 = vld [vmem:[#allocation3 + $0x1a] sm:$0xff]
    %v1524 = vld [vmem:[#allocation3 + $0x22] sm:$0xff]
    %v1525 = vld [vmem:[#allocation3 + $0x32] sm:$0xff]
    %v1526 = vld [vmem:[#allocation3 + $0x3a] sm:$0xff]
    %v1527 = vld [vmem:[#allocation3 + $0x4a] sm:$0xff]
    %v1528 = vld [vmem:[#allocation3 + $0x52] sm:$0xff]
    %v1529 = vld [vmem:[#allocation3 + $0x62] sm:$0xff]
    %v1530 = vld [vmem:[#allocation3 + $0x6a] sm:$0xff]
    %v1531 = vld [vmem:[#allocation3 + $0x7a] sm:$0xff]
    %v1532 = vld [vmem:[#allocation3 + $0x82] sm:$0xff]
    %v1533 = vld [vmem:[#allocation3 + $0x92] sm:$0xff]
    %v1534 = vld [vmem:[#allocation3 + $0x9a] sm:$0xff]
    %v1535 = vld [vmem:[#allocation3 + $0xaa] sm:$0xff]
    %v1536 = vld [vmem:[#allocation3 + $0xb2] sm:$0xff]
    %v1537 = vadd.f32 %v1505, %v1521
    %v1538 = vadd.f32 %v1506, %v1522
    %v1539 = vadd.f32 %v1507, %v1523
    %v1540 = vadd.f32 %v1508, %v1524
    %v1541 = vadd.f32 %v1509, %v1525
    %v1542 = vadd.f32 %v1510, %v1526
    %v1543 = vadd.f32 %v1511, %v1527
    %v1544 = vadd.f32 %v1512, %v1528
    %v1545 = vadd.f32 %v1513, %v1529
    %v1546 = vadd.f32 %v1514, %v1530
    %v1547 = vadd.f32 %v1515, %v1531
    %v1548 = vadd.f32 %v1516, %v1532
    %v1549 = vadd.f32 %v1517, %v1533
    %v1550 = vadd.f32 %v1518, %v1534
    %v1551 = vadd.f32 %v1519, %v1535
    %v1552 = vadd.f32 %v1520, %v1536
    %1569 = vrot.lane.b32.xlu0 %v1537, 127
    %v1570 = vpop.permute.xlu0 %1569
    %1571 = vrot.lane.b32.xlu0 %v1538, 127
    %v1572 = vpop.permute.xlu0 %1571
    %1573 = vrot.lane.b32.xlu0 %v1539, 127
    %v1574 = vpop.permute.xlu0 %1573
    %1575 = vrot.lane.b32.xlu0 %v1540, 127
    %v1576 = vpop.permute.xlu0 %1575
    %1577 = vrot.lane.b32.xlu0 %v1541, 127
    %v1578 = vpop.permute.xlu0 %1577
    %1579 = vrot.lane.b32.xlu0 %v1542, 127
    %v1580 = vpop.permute.xlu0 %1579
    %1581 = vrot.lane.b32.xlu0 %v1543, 127
    %v1582 = vpop.permute.xlu0 %1581
    %1583 = vrot.lane.b32.xlu0 %v1544, 127
    %v1584 = vpop.permute.xlu0 %1583
    %1585 = vrot.lane.b32.xlu0 %v1545, 127
    %v1586 = vpop.permute.xlu0 %1585
    %1587 = vrot.lane.b32.xlu0 %v1546, 127
    %v1588 = vpop.permute.xlu0 %1587
    %1589 = vrot.lane.b32.xlu0 %v1547, 127
    %v1590 = vpop.permute.xlu0 %1589
    %1591 = vrot.lane.b32.xlu0 %v1548, 127
    %v1592 = vpop.permute.xlu0 %1591
    %1593 = vrot.lane.b32.xlu0 %v1549, 127
    %v1594 = vpop.permute.xlu0 %1593
    %1595 = vrot.lane.b32.xlu0 %v1550, 127
    %v1596 = vpop.permute.xlu0 %1595
    %1597 = vrot.lane.b32.xlu0 %v1551, 127
    %v1598 = vpop.permute.xlu0 %1597
    %1599 = vrot.lane.b32.xlu0 %v1552, 127
    %v1600 = vpop.permute.xlu0 %1599
    %v1617 = vadd.f32 %v1537, %v1570
    %v1618 = vadd.f32 %v1538, %v1572
    %v1619 = vadd.f32 %v1539, %v1574
    %v1620 = vadd.f32 %v1540, %v1576
    %v1621 = vadd.f32 %v1541, %v1578
    %v1622 = vadd.f32 %v1542, %v1580
    %v1623 = vadd.f32 %v1543, %v1582
    %v1624 = vadd.f32 %v1544, %v1584
    %v1625 = vadd.f32 %v1545, %v1586
    %v1626 = vadd.f32 %v1546, %v1588
    %v1627 = vadd.f32 %v1547, %v1590
    %v1628 = vadd.f32 %v1548, %v1592
    %v1629 = vadd.f32 %v1549, %v1594
    %v1630 = vadd.f32 %v1550, %v1596
    %v1631 = vadd.f32 %v1551, %v1598
    %v1632 = vadd.f32 %v1552, %v1600
    %1633 = vrot.lane.b32.xlu0 %v1537, 126
    %v1634 = vpop.permute.xlu0 %1633
    %1635 = vrot.lane.b32.xlu0 %v1538, 126
    %v1636 = vpop.permute.xlu0 %1635
    %1637 = vrot.lane.b32.xlu0 %v1539, 126
    %v1638 = vpop.permute.xlu0 %1637
    %1639 = vrot.lane.b32.xlu0 %v1540, 126
    %v1640 = vpop.permute.xlu0 %1639
    %1641 = vrot.lane.b32.xlu0 %v1541, 126
    %v1642 = vpop.permute.xlu0 %1641
    %1643 = vrot.lane.b32.xlu0 %v1542, 126
    %v1644 = vpop.permute.xlu0 %1643
    %1645 = vrot.lane.b32.xlu0 %v1543, 126
    %v1646 = vpop.permute.xlu0 %1645
    %1647 = vrot.lane.b32.xlu0 %v1544, 126
    %v1648 = vpop.permute.xlu0 %1647
    %1649 = vrot.lane.b32.xlu0 %v1545, 126
    %v1650 = vpop.permute.xlu0 %1649
    %1651 = vrot.lane.b32.xlu0 %v1546, 126
    %v1652 = vpop.permute.xlu0 %1651
    %1653 = vrot.lane.b32.xlu0 %v1547, 126
    %v1654 = vpop.permute.xlu0 %1653
    %1655 = vrot.lane.b32.xlu0 %v1548, 126
    %v1656 = vpop.permute.xlu0 %1655
    %1657 = vrot.lane.b32.xlu0 %v1549, 126
    %v1658 = vpop.permute.xlu0 %1657
    %1659 = vrot.lane.b32.xlu0 %v1550, 126
    %v1660 = vpop.permute.xlu0 %1659
    %1661 = vrot.lane.b32.xlu0 %v1551, 126
    %v1662 = vpop.permute.xlu0 %1661
    %1663 = vrot.lane.b32.xlu0 %v1552, 126
    %v1664 = vpop.permute.xlu0 %1663
    %v1681 = vadd.f32 %v1617, %v1634
    %v1682 = vadd.f32 %v1618, %v1636
    %v1683 = vadd.f32 %v1619, %v1638
    %v1684 = vadd.f32 %v1620, %v1640
    %v1685 = vadd.f32 %v1621, %v1642
    %v1686 = vadd.f32 %v1622, %v1644
    %v1687 = vadd.f32 %v1623, %v1646
    %v1688 = vadd.f32 %v1624, %v1648
    %v1689 = vadd.f32 %v1625, %v1650
    %v1690 = vadd.f32 %v1626, %v1652
    %v1691 = vadd.f32 %v1627, %v1654
    %v1692 = vadd.f32 %v1628, %v1656
    %v1693 = vadd.f32 %v1629, %v1658
    %v1694 = vadd.f32 %v1630, %v1660
    %v1695 = vadd.f32 %v1631, %v1662
    %v1696 = vadd.f32 %v1632, %v1664
    %v1697 = vld [vmem:[#allocation4] sm:$0xff]
    %v1698 = vld [vmem:[#allocation4 + $0x8] sm:$0xff]
    %v1699 = vld [vmem:[#allocation4 + $0x18] sm:$0xff]
    %v1700 = vld [vmem:[#allocation4 + $0x20] sm:$0xff]
    %v1701 = vld [vmem:[#allocation4 + $0x30] sm:$0xff]
    %v1702 = vld [vmem:[#allocation4 + $0x38] sm:$0xff]
    %v1703 = vld [vmem:[#allocation4 + $0x48] sm:$0xff]
    %v1704 = vld [vmem:[#allocation4 + $0x50] sm:$0xff]
    %v1705 = vld [vmem:[#allocation4 + $0x60] sm:$0xff]
    %v1706 = vld [vmem:[#allocation4 + $0x68] sm:$0xff]
    %v1707 = vld [vmem:[#allocation4 + $0x78] sm:$0xff]
    %v1708 = vld [vmem:[#allocation4 + $0x80] sm:$0xff]
    %v1709 = vld [vmem:[#allocation4 + $0x90] sm:$0xff]
    %v1710 = vld [vmem:[#allocation4 + $0x98] sm:$0xff]
    %v1711 = vld [vmem:[#allocation4 + $0xa8] sm:$0xff]
    %v1712 = vld [vmem:[#allocation4 + $0xb0] sm:$0xff]
    %v1713 = vld [vmem:[#allocation4 + $0x1] sm:$0xff]
    %v1714 = vld [vmem:[#allocation4 + $0x9] sm:$0xff]
    %v1715 = vld [vmem:[#allocation4 + $0x19] sm:$0xff]
    %v1716 = vld [vmem:[#allocation4 + $0x21] sm:$0xff]
    %v1717 = vld [vmem:[#allocation4 + $0x31] sm:$0xff]
    %v1718 = vld [vmem:[#allocation4 + $0x39] sm:$0xff]
    %v1719 = vld [vmem:[#allocation4 + $0x49] sm:$0xff]
    %v1720 = vld [vmem:[#allocation4 + $0x51] sm:$0xff]
    %v1721 = vld [vmem:[#allocation4 + $0x61] sm:$0xff]
    %v1722 = vld [vmem:[#allocation4 + $0x69] sm:$0xff]
    %v1723 = vld [vmem:[#allocation4 + $0x79] sm:$0xff]
    %v1724 = vld [vmem:[#allocation4 + $0x81] sm:$0xff]
    %v1725 = vld [vmem:[#allocation4 + $0x91] sm:$0xff]
    %v1726 = vld [vmem:[#allocation4 + $0x99] sm:$0xff]
    %v1727 = vld [vmem:[#allocation4 + $0xa9] sm:$0xff]
    %v1728 = vld [vmem:[#allocation4 + $0xb1] sm:$0xff]
    %v1729 = vadd.f32 %v1697, %v1713
    %v1730 = vadd.f32 %v1698, %v1714
    %v1731 = vadd.f32 %v1699, %v1715
    %v1732 = vadd.f32 %v1700, %v1716
    %v1733 = vadd.f32 %v1701, %v1717
    %v1734 = vadd.f32 %v1702, %v1718
    %v1735 = vadd.f32 %v1703, %v1719
    %v1736 = vadd.f32 %v1704, %v1720
    %v1737 = vadd.f32 %v1705, %v1721
    %v1738 = vadd.f32 %v1706, %v1722
    %v1739 = vadd.f32 %v1707, %v1723
    %v1740 = vadd.f32 %v1708, %v1724
    %v1741 = vadd.f32 %v1709, %v1725
    %v1742 = vadd.f32 %v1710, %v1726
    %v1743 = vadd.f32 %v1711, %v1727
    %v1744 = vadd.f32 %v1712, %v1728
    %v1745 = vld [vmem:[#allocation4 + $0x2] sm:$0xff]
    %v1746 = vld [vmem:[#allocation4 + $0xa] sm:$0xff]
    %v1747 = vld [vmem:[#allocation4 + $0x1a] sm:$0xff]
    %v1748 = vld [vmem:[#allocation4 + $0x22] sm:$0xff]
    %v1749 = vld [vmem:[#allocation4 + $0x32] sm:$0xff]
    %v1750 = vld [vmem:[#allocation4 + $0x3a] sm:$0xff]
    %v1751 = vld [vmem:[#allocation4 + $0x4a] sm:$0xff]
    %v1752 = vld [vmem:[#allocation4 + $0x52] sm:$0xff]
    %v1753 = vld [vmem:[#allocation4 + $0x62] sm:$0xff]
    %v1754 = vld [vmem:[#allocation4 + $0x6a] sm:$0xff]
    %v1755 = vld [vmem:[#allocation4 + $0x7a] sm:$0xff]
    %v1756 = vld [vmem:[#allocation4 + $0x82] sm:$0xff]
    %v1757 = vld [vmem:[#allocation4 + $0x92] sm:$0xff]
    %v1758 = vld [vmem:[#allocation4 + $0x9a] sm:$0xff]
    %v1759 = vld [vmem:[#allocation4 + $0xaa] sm:$0xff]
    %v1760 = vld [vmem:[#allocation4 + $0xb2] sm:$0xff]
    %v1761 = vadd.f32 %v1729, %v1745
    %v1762 = vadd.f32 %v1730, %v1746
    %v1763 = vadd.f32 %v1731, %v1747
    %v1764 = vadd.f32 %v1732, %v1748
    %v1765 = vadd.f32 %v1733, %v1749
    %v1766 = vadd.f32 %v1734, %v1750
    %v1767 = vadd.f32 %v1735, %v1751
    %v1768 = vadd.f32 %v1736, %v1752
    %v1769 = vadd.f32 %v1737, %v1753
    %v1770 = vadd.f32 %v1738, %v1754
    %v1771 = vadd.f32 %v1739, %v1755
    %v1772 = vadd.f32 %v1740, %v1756
    %v1773 = vadd.f32 %v1741, %v1757
    %v1774 = vadd.f32 %v1742, %v1758
    %v1775 = vadd.f32 %v1743, %v1759
    %v1776 = vadd.f32 %v1744, %v1760
    %1793 = vrot.lane.b32.xlu0 %v1761, 127
    %v1794 = vpop.permute.xlu0 %1793
    %1795 = vrot.lane.b32.xlu0 %v1762, 127
    %v1796 = vpop.permute.xlu0 %1795
    %1797 = vrot.lane.b32.xlu0 %v1763, 127
    %v1798 = vpop.permute.xlu0 %1797
    %1799 = vrot.lane.b32.xlu0 %v1764, 127
    %v1800 = vpop.permute.xlu0 %1799
    %1801 = vrot.lane.b32.xlu0 %v1765, 127
    %v1802 = vpop.permute.xlu0 %1801
    %1803 = vrot.lane.b32.xlu0 %v1766, 127
    %v1804 = vpop.permute.xlu0 %1803
    %1805 = vrot.lane.b32.xlu0 %v1767, 127
    %v1806 = vpop.permute.xlu0 %1805
    %1807 = vrot.lane.b32.xlu0 %v1768, 127
    %v1808 = vpop.permute.xlu0 %1807
    %1809 = vrot.lane.b32.xlu0 %v1769, 127
    %v1810 = vpop.permute.xlu0 %1809
    %1811 = vrot.lane.b32.xlu0 %v1770, 127
    %v1812 = vpop.permute.xlu0 %1811
    %1813 = vrot.lane.b32.xlu0 %v1771, 127
    %v1814 = vpop.permute.xlu0 %1813
    %1815 = vrot.lane.b32.xlu0 %v1772, 127
    %v1816 = vpop.permute.xlu0 %1815
    %1817 = vrot.lane.b32.xlu0 %v1773, 127
    %v1818 = vpop.permute.xlu0 %1817
    %1819 = vrot.lane.b32.xlu0 %v1774, 127
    %v1820 = vpop.permute.xlu0 %1819
    %1821 = vrot.lane.b32.xlu0 %v1775, 127
    %v1822 = vpop.permute.xlu0 %1821
    %1823 = vrot.lane.b32.xlu0 %v1776, 127
    %v1824 = vpop.permute.xlu0 %1823
    %v1841 = vadd.f32 %v1761, %v1794
    %v1842 = vadd.f32 %v1762, %v1796
    %v1843 = vadd.f32 %v1763, %v1798
    %v1844 = vadd.f32 %v1764, %v1800
    %v1845 = vadd.f32 %v1765, %v1802
    %v1846 = vadd.f32 %v1766, %v1804
    %v1847 = vadd.f32 %v1767, %v1806
    %v1848 = vadd.f32 %v1768, %v1808
    %v1849 = vadd.f32 %v1769, %v1810
    %v1850 = vadd.f32 %v1770, %v1812
    %v1851 = vadd.f32 %v1771, %v1814
    %v1852 = vadd.f32 %v1772, %v1816
    %v1853 = vadd.f32 %v1773, %v1818
    %v1854 = vadd.f32 %v1774, %v1820
    %v1855 = vadd.f32 %v1775, %v1822
    %v1856 = vadd.f32 %v1776, %v1824
    %1857 = vrot.lane.b32.xlu0 %v1761, 126
    %v1858 = vpop.permute.xlu0 %1857
    %1859 = vrot.lane.b32.xlu0 %v1762, 126
    %v1860 = vpop.permute.xlu0 %1859
    %1861 = vrot.lane.b32.xlu0 %v1763, 126
    %v1862 = vpop.permute.xlu0 %1861
    %1863 = vrot.lane.b32.xlu0 %v1764, 126
    %v1864 = vpop.permute.xlu0 %1863
    %1865 = vrot.lane.b32.xlu0 %v1765, 126
    %v1866 = vpop.permute.xlu0 %1865
    %1867 = vrot.lane.b32.xlu0 %v1766, 126
    %v1868 = vpop.permute.xlu0 %1867
    %1869 = vrot.lane.b32.xlu0 %v1767, 126
    %v1870 = vpop.permute.xlu0 %1869
    %1871 = vrot.lane.b32.xlu0 %v1768, 126
    %v1872 = vpop.permute.xlu0 %1871
    %1873 = vrot.lane.b32.xlu0 %v1769, 126
    %v1874 = vpop.permute.xlu0 %1873
    %1875 = vrot.lane.b32.xlu0 %v1770, 126
    %v1876 = vpop.permute.xlu0 %1875
    %1877 = vrot.lane.b32.xlu0 %v1771, 126
    %v1878 = vpop.permute.xlu0 %1877
    %1879 = vrot.lane.b32.xlu0 %v1772, 126
    %v1880 = vpop.permute.xlu0 %1879
    %1881 = vrot.lane.b32.xlu0 %v1773, 126
    %v1882 = vpop.permute.xlu0 %1881
    %1883 = vrot.lane.b32.xlu0 %v1774, 126
    %v1884 = vpop.permute.xlu0 %1883
    %1885 = vrot.lane.b32.xlu0 %v1775, 126
    %v1886 = vpop.permute.xlu0 %1885
    %1887 = vrot.lane.b32.xlu0 %v1776, 126
    %v1888 = vpop.permute.xlu0 %1887
    %v1905 = vadd.f32 %v1841, %v1858
    %v1906 = vadd.f32 %v1842, %v1860
    %v1907 = vadd.f32 %v1843, %v1862
    %v1908 = vadd.f32 %v1844, %v1864
    %v1909 = vadd.f32 %v1845, %v1866
    %v1910 = vadd.f32 %v1846, %v1868
    %v1911 = vadd.f32 %v1847, %v1870
    %v1912 = vadd.f32 %v1848, %v1872
    %v1913 = vadd.f32 %v1849, %v1874
    %v1914 = vadd.f32 %v1850, %v1876
    %v1915 = vadd.f32 %v1851, %v1878
    %v1916 = vadd.f32 %v1852, %v1880
    %v1917 = vadd.f32 %v1853, %v1882
    %v1918 = vadd.f32 %v1854, %v1884
    %v1919 = vadd.f32 %v1855, %v1886
    %v1920 = vadd.f32 %v1856, %v1888
    %v1921 = vld [vmem:[#allocation5] sm:$0xff]
    %v1922 = vld [vmem:[#allocation5 + $0x8] sm:$0xff]
    %v1923 = vld [vmem:[#allocation5 + $0x18] sm:$0xff]
    %v1924 = vld [vmem:[#allocation5 + $0x20] sm:$0xff]
    %v1925 = vld [vmem:[#allocation5 + $0x30] sm:$0xff]
    %v1926 = vld [vmem:[#allocation5 + $0x38] sm:$0xff]
    %v1927 = vld [vmem:[#allocation5 + $0x48] sm:$0xff]
    %v1928 = vld [vmem:[#allocation5 + $0x50] sm:$0xff]
    %v1929 = vld [vmem:[#allocation5 + $0x60] sm:$0xff]
    %v1930 = vld [vmem:[#allocation5 + $0x68] sm:$0xff]
    %v1931 = vld [vmem:[#allocation5 + $0x78] sm:$0xff]
    %v1932 = vld [vmem:[#allocation5 + $0x80] sm:$0xff]
    %v1933 = vld [vmem:[#allocation5 + $0x90] sm:$0xff]
    %v1934 = vld [vmem:[#allocation5 + $0x98] sm:$0xff]
    %v1935 = vld [vmem:[#allocation5 + $0xa8] sm:$0xff]
    %v1936 = vld [vmem:[#allocation5 + $0xb0] sm:$0xff]
    %v1937 = vld [vmem:[#allocation5 + $0x1] sm:$0xff]
    %v1938 = vld [vmem:[#allocation5 + $0x9] sm:$0xff]
    %v1939 = vld [vmem:[#allocation5 + $0x19] sm:$0xff]
    %v1940 = vld [vmem:[#allocation5 + $0x21] sm:$0xff]
    %v1941 = vld [vmem:[#allocation5 + $0x31] sm:$0xff]
    %v1942 = vld [vmem:[#allocation5 + $0x39] sm:$0xff]
    %v1943 = vld [vmem:[#allocation5 + $0x49] sm:$0xff]
    %v1944 = vld [vmem:[#allocation5 + $0x51] sm:$0xff]
    %v1945 = vld [vmem:[#allocation5 + $0x61] sm:$0xff]
    %v1946 = vld [vmem:[#allocation5 + $0x69] sm:$0xff]
    %v1947 = vld [vmem:[#allocation5 + $0x79] sm:$0xff]
    %v1948 = vld [vmem:[#allocation5 + $0x81] sm:$0xff]
    %v1949 = vld [vmem:[#allocation5 + $0x91] sm:$0xff]
    %v1950 = vld [vmem:[#allocation5 + $0x99] sm:$0xff]
    %v1951 = vld [vmem:[#allocation5 + $0xa9] sm:$0xff]
    %v1952 = vld [vmem:[#allocation5 + $0xb1] sm:$0xff]
    %v1953 = vadd.f32 %v1921, %v1937
    %v1954 = vadd.f32 %v1922, %v1938
    %v1955 = vadd.f32 %v1923, %v1939
    %v1956 = vadd.f32 %v1924, %v1940
    %v1957 = vadd.f32 %v1925, %v1941
    %v1958 = vadd.f32 %v1926, %v1942
    %v1959 = vadd.f32 %v1927, %v1943
    %v1960 = vadd.f32 %v1928, %v1944
    %v1961 = vadd.f32 %v1929, %v1945
    %v1962 = vadd.f32 %v1930, %v1946
    %v1963 = vadd.f32 %v1931, %v1947
    %v1964 = vadd.f32 %v1932, %v1948
    %v1965 = vadd.f32 %v1933, %v1949
    %v1966 = vadd.f32 %v1934, %v1950
    %v1967 = vadd.f32 %v1935, %v1951
    %v1968 = vadd.f32 %v1936, %v1952
    %v1969 = vld [vmem:[#allocation5 + $0x2] sm:$0xff]
    %v1970 = vld [vmem:[#allocation5 + $0xa] sm:$0xff]
    %v1971 = vld [vmem:[#allocation5 + $0x1a] sm:$0xff]
    %v1972 = vld [vmem:[#allocation5 + $0x22] sm:$0xff]
    %v1973 = vld [vmem:[#allocation5 + $0x32] sm:$0xff]
    %v1974 = vld [vmem:[#allocation5 + $0x3a] sm:$0xff]
    %v1975 = vld [vmem:[#allocation5 + $0x4a] sm:$0xff]
    %v1976 = vld [vmem:[#allocation5 + $0x52] sm:$0xff]
    %v1977 = vld [vmem:[#allocation5 + $0x62] sm:$0xff]
    %v1978 = vld [vmem:[#allocation5 + $0x6a] sm:$0xff]
    %v1979 = vld [vmem:[#allocation5 + $0x7a] sm:$0xff]
    %v1980 = vld [vmem:[#allocation5 + $0x82] sm:$0xff]
    %v1981 = vld [vmem:[#allocation5 + $0x92] sm:$0xff]
    %v1982 = vld [vmem:[#allocation5 + $0x9a] sm:$0xff]
    %v1983 = vld [vmem:[#allocation5 + $0xaa] sm:$0xff]
    %v1984 = vld [vmem:[#allocation5 + $0xb2] sm:$0xff]
    %v1985 = vadd.f32 %v1953, %v1969
    %v1986 = vadd.f32 %v1954, %v1970
    %v1987 = vadd.f32 %v1955, %v1971
    %v1988 = vadd.f32 %v1956, %v1972
    %v1989 = vadd.f32 %v1957, %v1973
    %v1990 = vadd.f32 %v1958, %v1974
    %v1991 = vadd.f32 %v1959, %v1975
    %v1992 = vadd.f32 %v1960, %v1976
    %v1993 = vadd.f32 %v1961, %v1977
    %v1994 = vadd.f32 %v1962, %v1978
    %v1995 = vadd.f32 %v1963, %v1979
    %v1996 = vadd.f32 %v1964, %v1980
    %v1997 = vadd.f32 %v1965, %v1981
    %v1998 = vadd.f32 %v1966, %v1982
    %v1999 = vadd.f32 %v1967, %v1983
    %v2000 = vadd.f32 %v1968, %v1984
    %2017 = vrot.lane.b32.xlu0 %v1985, 127
    %v2018 = vpop.permute.xlu0 %2017
    %2019 = vrot.lane.b32.xlu0 %v1986, 127
    %v2020 = vpop.permute.xlu0 %2019
    %2021 = vrot.lane.b32.xlu0 %v1987, 127
    %v2022 = vpop.permute.xlu0 %2021
    %2023 = vrot.lane.b32.xlu0 %v1988, 127
    %v2024 = vpop.permute.xlu0 %2023
    %2025 = vrot.lane.b32.xlu0 %v1989, 127
    %v2026 = vpop.permute.xlu0 %2025
    %2027 = vrot.lane.b32.xlu0 %v1990, 127
    %v2028 = vpop.permute.xlu0 %2027
    %2029 = vrot.lane.b32.xlu0 %v1991, 127
    %v2030 = vpop.permute.xlu0 %2029
    %2031 = vrot.lane.b32.xlu0 %v1992, 127
    %v2032 = vpop.permute.xlu0 %2031
    %2033 = vrot.lane.b32.xlu0 %v1993, 127
    %v2034 = vpop.permute.xlu0 %2033
    %2035 = vrot.lane.b32.xlu0 %v1994, 127
    %v2036 = vpop.permute.xlu0 %2035
    %2037 = vrot.lane.b32.xlu0 %v1995, 127
    %v2038 = vpop.permute.xlu0 %2037
    %2039 = vrot.lane.b32.xlu0 %v1996, 127
    %v2040 = vpop.permute.xlu0 %2039
    %2041 = vrot.lane.b32.xlu0 %v1997, 127
    %v2042 = vpop.permute.xlu0 %2041
    %2043 = vrot.lane.b32.xlu0 %v1998, 127
    %v2044 = vpop.permute.xlu0 %2043
    %2045 = vrot.lane.b32.xlu0 %v1999, 127
    %v2046 = vpop.permute.xlu0 %2045
    %2047 = vrot.lane.b32.xlu0 %v2000, 127
    %v2048 = vpop.permute.xlu0 %2047
    %v2065 = vadd.f32 %v1985, %v2018
    %v2066 = vadd.f32 %v1986, %v2020
    %v2067 = vadd.f32 %v1987, %v2022
    %v2068 = vadd.f32 %v1988, %v2024
    %v2069 = vadd.f32 %v1989, %v2026
    %v2070 = vadd.f32 %v1990, %v2028
    %v2071 = vadd.f32 %v1991, %v2030
    %v2072 = vadd.f32 %v1992, %v2032
    %v2073 = vadd.f32 %v1993, %v2034
    %v2074 = vadd.f32 %v1994, %v2036
    %v2075 = vadd.f32 %v1995, %v2038
    %v2076 = vadd.f32 %v1996, %v2040
    %v2077 = vadd.f32 %v1997, %v2042
    %v2078 = vadd.f32 %v1998, %v2044
    %v2079 = vadd.f32 %v1999, %v2046
    %v2080 = vadd.f32 %v2000, %v2048
    %2081 = vrot.lane.b32.xlu0 %v1985, 126
    %v2082 = vpop.permute.xlu0 %2081
    %2083 = vrot.lane.b32.xlu0 %v1986, 126
    %v2084 = vpop.permute.xlu0 %2083
    %2085 = vrot.lane.b32.xlu0 %v1987, 126
    %v2086 = vpop.permute.xlu0 %2085
    %2087 = vrot.lane.b32.xlu0 %v1988, 126
    %v2088 = vpop.permute.xlu0 %2087
    %2089 = vrot.lane.b32.xlu0 %v1989, 126
    %v2090 = vpop.permute.xlu0 %2089
    %2091 = vrot.lane.b32.xlu0 %v1990, 126
    %v2092 = vpop.permute.xlu0 %2091
    %2093 = vrot.lane.b32.xlu0 %v1991, 126
    %v2094 = vpop.permute.xlu0 %2093
    %2095 = vrot.lane.b32.xlu0 %v1992, 126
    %v2096 = vpop.permute.xlu0 %2095
    %2097 = vrot.lane.b32.xlu0 %v1993, 126
    %v2098 = vpop.permute.xlu0 %2097
    %2099 = vrot.lane.b32.xlu0 %v1994, 126
    %v2100 = vpop.permute.xlu0 %2099
    %2101 = vrot.lane.b32.xlu0 %v1995, 126
    %v2102 = vpop.permute.xlu0 %2101
    %2103 = vrot.lane.b32.xlu0 %v1996, 126
    %v2104 = vpop.permute.xlu0 %2103
    %2105 = vrot.lane.b32.xlu0 %v1997, 126
    %v2106 = vpop.permute.xlu0 %2105
    %2107 = vrot.lane.b32.xlu0 %v1998, 126
    %v2108 = vpop.permute.xlu0 %2107
    %2109 = vrot.lane.b32.xlu0 %v1999, 126
    %v2110 = vpop.permute.xlu0 %2109
    %2111 = vrot.lane.b32.xlu0 %v2000, 126
    %v2112 = vpop.permute.xlu0 %2111
    %v2129 = vadd.f32 %v2065, %v2082
    %v2130 = vadd.f32 %v2066, %v2084
    %v2131 = vadd.f32 %v2067, %v2086
    %v2132 = vadd.f32 %v2068, %v2088
    %v2133 = vadd.f32 %v2069, %v2090
    %v2134 = vadd.f32 %v2070, %v2092
    %v2135 = vadd.f32 %v2071, %v2094
    %v2136 = vadd.f32 %v2072, %v2096
    %v2137 = vadd.f32 %v2073, %v2098
    %v2138 = vadd.f32 %v2074, %v2100
    %v2139 = vadd.f32 %v2075, %v2102
    %v2140 = vadd.f32 %v2076, %v2104
    %v2141 = vadd.f32 %v2077, %v2106
    %v2142 = vadd.f32 %v2078, %v2108
    %v2143 = vadd.f32 %v2079, %v2110
    %v2144 = vadd.f32 %v2080, %v2112
    %v2145 = vld [vmem:[#allocation6] sm:$0xff]
    %v2146 = vld [vmem:[#allocation6 + $0x8] sm:$0xff]
    %v2147 = vld [vmem:[#allocation6 + $0x18] sm:$0xff]
    %v2148 = vld [vmem:[#allocation6 + $0x20] sm:$0xff]
    %v2149 = vld [vmem:[#allocation6 + $0x30] sm:$0xff]
    %v2150 = vld [vmem:[#allocation6 + $0x38] sm:$0xff]
    %v2151 = vld [vmem:[#allocation6 + $0x48] sm:$0xff]
    %v2152 = vld [vmem:[#allocation6 + $0x50] sm:$0xff]
    %v2153 = vld [vmem:[#allocation6 + $0x60] sm:$0xff]
    %v2154 = vld [vmem:[#allocation6 + $0x68] sm:$0xff]
    %v2155 = vld [vmem:[#allocation6 + $0x78] sm:$0xff]
    %v2156 = vld [vmem:[#allocation6 + $0x80] sm:$0xff]
    %v2157 = vld [vmem:[#allocation6 + $0x90] sm:$0xff]
    %v2158 = vld [vmem:[#allocation6 + $0x98] sm:$0xff]
    %v2159 = vld [vmem:[#allocation6 + $0xa8] sm:$0xff]
    %v2160 = vld [vmem:[#allocation6 + $0xb0] sm:$0xff]
    %v2161 = vld [vmem:[#allocation6 + $0x1] sm:$0xff]
    %v2162 = vld [vmem:[#allocation6 + $0x9] sm:$0xff]
    %v2163 = vld [vmem:[#allocation6 + $0x19] sm:$0xff]
    %v2164 = vld [vmem:[#allocation6 + $0x21] sm:$0xff]
    %v2165 = vld [vmem:[#allocation6 + $0x31] sm:$0xff]
    %v2166 = vld [vmem:[#allocation6 + $0x39] sm:$0xff]
    %v2167 = vld [vmem:[#allocation6 + $0x49] sm:$0xff]
    %v2168 = vld [vmem:[#allocation6 + $0x51] sm:$0xff]
    %v2169 = vld [vmem:[#allocation6 + $0x61] sm:$0xff]
    %v2170 = vld [vmem:[#allocation6 + $0x69] sm:$0xff]
    %v2171 = vld [vmem:[#allocation6 + $0x79] sm:$0xff]
    %v2172 = vld [vmem:[#allocation6 + $0x81] sm:$0xff]
    %v2173 = vld [vmem:[#allocation6 + $0x91] sm:$0xff]
    %v2174 = vld [vmem:[#allocation6 + $0x99] sm:$0xff]
    %v2175 = vld [vmem:[#allocation6 + $0xa9] sm:$0xff]
    %v2176 = vld [vmem:[#allocation6 + $0xb1] sm:$0xff]
    %v2177 = vadd.f32 %v2145, %v2161
    %v2178 = vadd.f32 %v2146, %v2162
    %v2179 = vadd.f32 %v2147, %v2163
    %v2180 = vadd.f32 %v2148, %v2164
    %v2181 = vadd.f32 %v2149, %v2165
    %v2182 = vadd.f32 %v2150, %v2166
    %v2183 = vadd.f32 %v2151, %v2167
    %v2184 = vadd.f32 %v2152, %v2168
    %v2185 = vadd.f32 %v2153, %v2169
    %v2186 = vadd.f32 %v2154, %v2170
    %v2187 = vadd.f32 %v2155, %v2171
    %v2188 = vadd.f32 %v2156, %v2172
    %v2189 = vadd.f32 %v2157, %v2173
    %v2190 = vadd.f32 %v2158, %v2174
    %v2191 = vadd.f32 %v2159, %v2175
    %v2192 = vadd.f32 %v2160, %v2176
    %v2193 = vld [vmem:[#allocation6 + $0x2] sm:$0xff]
    %v2194 = vld [vmem:[#allocation6 + $0xa] sm:$0xff]
    %v2195 = vld [vmem:[#allocation6 + $0x1a] sm:$0xff]
    %v2196 = vld [vmem:[#allocation6 + $0x22] sm:$0xff]
    %v2197 = vld [vmem:[#allocation6 + $0x32] sm:$0xff]
    %v2198 = vld [vmem:[#allocation6 + $0x3a] sm:$0xff]
    %v2199 = vld [vmem:[#allocation6 + $0x4a] sm:$0xff]
    %v2200 = vld [vmem:[#allocation6 + $0x52] sm:$0xff]
    %v2201 = vld [vmem:[#allocation6 + $0x62] sm:$0xff]
    %v2202 = vld [vmem:[#allocation6 + $0x6a] sm:$0xff]
    %v2203 = vld [vmem:[#allocation6 + $0x7a] sm:$0xff]
    %v2204 = vld [vmem:[#allocation6 + $0x82] sm:$0xff]
    %v2205 = vld [vmem:[#allocation6 + $0x92] sm:$0xff]
    %v2206 = vld [vmem:[#allocation6 + $0x9a] sm:$0xff]
    %v2207 = vld [vmem:[#allocation6 + $0xaa] sm:$0xff]
    %v2208 = vld [vmem:[#allocation6 + $0xb2] sm:$0xff]
    %v2209 = vadd.f32 %v2177, %v2193
    %v2210 = vadd.f32 %v2178, %v2194
    %v2211 = vadd.f32 %v2179, %v2195
    %v2212 = vadd.f32 %v2180, %v2196
    %v2213 = vadd.f32 %v2181, %v2197
    %v2214 = vadd.f32 %v2182, %v2198
    %v2215 = vadd.f32 %v2183, %v2199
    %v2216 = vadd.f32 %v2184, %v2200
    %v2217 = vadd.f32 %v2185, %v2201
    %v2218 = vadd.f32 %v2186, %v2202
    %v2219 = vadd.f32 %v2187, %v2203
    %v2220 = vadd.f32 %v2188, %v2204
    %v2221 = vadd.f32 %v2189, %v2205
    %v2222 = vadd.f32 %v2190, %v2206
    %v2223 = vadd.f32 %v2191, %v2207
    %v2224 = vadd.f32 %v2192, %v2208
    %2241 = vrot.lane.b32.xlu0 %v2209, 127
    %v2242 = vpop.permute.xlu0 %2241
    %2243 = vrot.lane.b32.xlu0 %v2210, 127
    %v2244 = vpop.permute.xlu0 %2243
    %2245 = vrot.lane.b32.xlu0 %v2211, 127
    %v2246 = vpop.permute.xlu0 %2245
    %2247 = vrot.lane.b32.xlu0 %v2212, 127
    %v2248 = vpop.permute.xlu0 %2247
    %2249 = vrot.lane.b32.xlu0 %v2213, 127
    %v2250 = vpop.permute.xlu0 %2249
    %2251 = vrot.lane.b32.xlu0 %v2214, 127
    %v2252 = vpop.permute.xlu0 %2251
    %2253 = vrot.lane.b32.xlu0 %v2215, 127
    %v2254 = vpop.permute.xlu0 %2253
    %2255 = vrot.lane.b32.xlu0 %v2216, 127
    %v2256 = vpop.permute.xlu0 %2255
    %2257 = vrot.lane.b32.xlu0 %v2217, 127
    %v2258 = vpop.permute.xlu0 %2257
    %2259 = vrot.lane.b32.xlu0 %v2218, 127
    %v2260 = vpop.permute.xlu0 %2259
    %2261 = vrot.lane.b32.xlu0 %v2219, 127
    %v2262 = vpop.permute.xlu0 %2261
    %2263 = vrot.lane.b32.xlu0 %v2220, 127
    %v2264 = vpop.permute.xlu0 %2263
    %2265 = vrot.lane.b32.xlu0 %v2221, 127
    %v2266 = vpop.permute.xlu0 %2265
    %2267 = vrot.lane.b32.xlu0 %v2222, 127
    %v2268 = vpop.permute.xlu0 %2267
    %2269 = vrot.lane.b32.xlu0 %v2223, 127
    %v2270 = vpop.permute.xlu0 %2269
    %2271 = vrot.lane.b32.xlu0 %v2224, 127
    %v2272 = vpop.permute.xlu0 %2271
    %v2289 = vadd.f32 %v2209, %v2242
    %v2290 = vadd.f32 %v2210, %v2244
    %v2291 = vadd.f32 %v2211, %v2246
    %v2292 = vadd.f32 %v2212, %v2248
    %v2293 = vadd.f32 %v2213, %v2250
    %v2294 = vadd.f32 %v2214, %v2252
    %v2295 = vadd.f32 %v2215, %v2254
    %v2296 = vadd.f32 %v2216, %v2256
    %v2297 = vadd.f32 %v2217, %v2258
    %v2298 = vadd.f32 %v2218, %v2260
    %v2299 = vadd.f32 %v2219, %v2262
    %v2300 = vadd.f32 %v2220, %v2264
    %v2301 = vadd.f32 %v2221, %v2266
    %v2302 = vadd.f32 %v2222, %v2268
    %v2303 = vadd.f32 %v2223, %v2270
    %v2304 = vadd.f32 %v2224, %v2272
    %2305 = vrot.lane.b32.xlu0 %v2209, 126
    %v2306 = vpop.permute.xlu0 %2305
    %2307 = vrot.lane.b32.xlu0 %v2210, 126
    %v2308 = vpop.permute.xlu0 %2307
    %2309 = vrot.lane.b32.xlu0 %v2211, 126
    %v2310 = vpop.permute.xlu0 %2309
    %2311 = vrot.lane.b32.xlu0 %v2212, 126
    %v2312 = vpop.permute.xlu0 %2311
    %2313 = vrot.lane.b32.xlu0 %v2213, 126
    %v2314 = vpop.permute.xlu0 %2313
    %2315 = vrot.lane.b32.xlu0 %v2214, 126
    %v2316 = vpop.permute.xlu0 %2315
    %2317 = vrot.lane.b32.xlu0 %v2215, 126
    %v2318 = vpop.permute.xlu0 %2317
    %2319 = vrot.lane.b32.xlu0 %v2216, 126
    %v2320 = vpop.permute.xlu0 %2319
    %2321 = vrot.lane.b32.xlu0 %v2217, 126
    %v2322 = vpop.permute.xlu0 %2321
    %2323 = vrot.lane.b32.xlu0 %v2218, 126
    %v2324 = vpop.permute.xlu0 %2323
    %2325 = vrot.lane.b32.xlu0 %v2219, 126
    %v2326 = vpop.permute.xlu0 %2325
    %2327 = vrot.lane.b32.xlu0 %v2220, 126
    %v2328 = vpop.permute.xlu0 %2327
    %2329 = vrot.lane.b32.xlu0 %v2221, 126
    %v2330 = vpop.permute.xlu0 %2329
    %2331 = vrot.lane.b32.xlu0 %v2222, 126
    %v2332 = vpop.permute.xlu0 %2331
    %2333 = vrot.lane.b32.xlu0 %v2223, 126
    %v2334 = vpop.permute.xlu0 %2333
    %2335 = vrot.lane.b32.xlu0 %v2224, 126
    %v2336 = vpop.permute.xlu0 %2335
    %v2353 = vadd.f32 %v2289, %v2306
    %v2354 = vadd.f32 %v2290, %v2308
    %v2355 = vadd.f32 %v2291, %v2310
    %v2356 = vadd.f32 %v2292, %v2312
    %v2357 = vadd.f32 %v2293, %v2314
    %v2358 = vadd.f32 %v2294, %v2316
    %v2359 = vadd.f32 %v2295, %v2318
    %v2360 = vadd.f32 %v2296, %v2320
    %v2361 = vadd.f32 %v2297, %v2322
    %v2362 = vadd.f32 %v2298, %v2324
    %v2363 = vadd.f32 %v2299, %v2326
    %v2364 = vadd.f32 %v2300, %v2328
    %v2365 = vadd.f32 %v2301, %v2330
    %v2366 = vadd.f32 %v2302, %v2332
    %v2367 = vadd.f32 %v2303, %v2334
    %v2368 = vadd.f32 %v2304, %v2336
    %v2369 = vmul.f32 %v1457, %v1681
    %v2370 = vmul.f32 %v1458, %v1682
    %v2371 = vmul.f32 %v1459, %v1683
    %v2372 = vmul.f32 %v1460, %v1684
    %v2373 = vmul.f32 %v1461, %v1685
    %v2374 = vmul.f32 %v1462, %v1686
    %v2375 = vmul.f32 %v1463, %v1687
    %v2376 = vmul.f32 %v1464, %v1688
    %v2377 = vmul.f32 %v1465, %v1689
    %v2378 = vmul.f32 %v1466, %v1690
    %v2379 = vmul.f32 %v1467, %v1691
    %v2380 = vmul.f32 %v1468, %v1692
    %v2381 = vmul.f32 %v1469, %v1693
    %v2382 = vmul.f32 %v1470, %v1694
    %v2383 = vmul.f32 %v1471, %v1695
    %v2384 = vmul.f32 %v1472, %v1696
    %v2385 = vmul.f32 %v1457, %v1457
    %v2386 = vmul.f32 %v1458, %v1458
    %v2387 = vmul.f32 %v1459, %v1459
    %v2388 = vmul.f32 %v1460, %v1460
    %v2389 = vmul.f32 %v1461, %v1461
    %v2390 = vmul.f32 %v1462, %v1462
    %v2391 = vmul.f32 %v1463, %v1463
    %v2392 = vmul.f32 %v1464, %v1464
    %v2393 = vmul.f32 %v1465, %v1465
    %v2394 = vmul.f32 %v1466, %v1466
    %v2395 = vmul.f32 %v1467, %v1467
    %v2396 = vmul.f32 %v1468, %v1468
    %v2397 = vmul.f32 %v1469, %v1469
    %v2398 = vmul.f32 %v1470, %v1470
    %v2399 = vmul.f32 %v1471, %v1471
    %v2400 = vmul.f32 %v1472, %v1472
    %v2401 = vmul.f32 %v1681, %v1681
    %v2402 = vmul.f32 %v1682, %v1682
    %v2403 = vmul.f32 %v1683, %v1683
    %v2404 = vmul.f32 %v1684, %v1684
    %v2405 = vmul.f32 %v1685, %v1685
    %v2406 = vmul.f32 %v1686, %v1686
    %v2407 = vmul.f32 %v1687, %v1687
    %v2408 = vmul.f32 %v1688, %v1688
    %v2409 = vmul.f32 %v1689, %v1689
    %v2410 = vmul.f32 %v1690, %v1690
    %v2411 = vmul.f32 %v1691, %v1691
    %v2412 = vmul.f32 %v1692, %v1692
    %v2413 = vmul.f32 %v1693, %v1693
    %v2414 = vmul.f32 %v1694, %v1694
    %v2415 = vmul.f32 %v1695, %v1695
    %v2416 = vmul.f32 %v1696, %v1696
    %v2417 = vadd.f32 %v2385, %v2401
    %v2418 = vadd.f32 %v2386, %v2402
    %v2419 = vadd.f32 %v2387, %v2403
    %v2420 = vadd.f32 %v2388, %v2404
    %v2421 = vadd.f32 %v2389, %v2405
    %v2422 = vadd.f32 %v2390, %v2406
    %v2423 = vadd.f32 %v2391, %v2407
    %v2424 = vadd.f32 %v2392, %v2408
    %v2425 = vadd.f32 %v2393, %v2409
    %v2426 = vadd.f32 %v2394, %v2410
    %v2427 = vadd.f32 %v2395, %v2411
    %v2428 = vadd.f32 %v2396, %v2412
    %v2429 = vadd.f32 %v2397, %v2413
    %v2430 = vadd.f32 %v2398, %v2414
    %v2431 = vadd.f32 %v2399, %v2415
    %v2432 = vadd.f32 %v2400, %v2416
    %v2433 = vmul.f32 %v2369, 2.0
    %v2434 = vmul.f32 %v2370, 2.0
    %v2435 = vmul.f32 %v2371, 2.0
    %v2436 = vmul.f32 %v2372, 2.0
    %v2437 = vmul.f32 %v2373, 2.0
    %v2438 = vmul.f32 %v2374, 2.0
    %v2439 = vmul.f32 %v2375, 2.0
    %v2440 = vmul.f32 %v2376, 2.0
    %v2441 = vmul.f32 %v2377, 2.0
    %v2442 = vmul.f32 %v2378, 2.0
    %v2443 = vmul.f32 %v2379, 2.0
    %v2444 = vmul.f32 %v2380, 2.0
    %v2445 = vmul.f32 %v2381, 2.0
    %v2446 = vmul.f32 %v2382, 2.0
    %v2447 = vmul.f32 %v2383, 2.0
    %v2448 = vmul.f32 %v2384, 2.0
    %v2449 = vadd.f32 %v2433, 0.0081
    %v2450 = vadd.f32 %v2434, 0.0081
    %v2451 = vadd.f32 %v2435, 0.0081
    %v2452 = vadd.f32 %v2436, 0.0081
    %v2453 = vadd.f32 %v2437, 0.0081
    %v2454 = vadd.f32 %v2438, 0.0081
    %v2455 = vadd.f32 %v2439, 0.0081
    %v2456 = vadd.f32 %v2440, 0.0081
    %v2457 = vadd.f32 %v2441, 0.0081
    %v2458 = vadd.f32 %v2442, 0.0081
    %v2459 = vadd.f32 %v2443, 0.0081
    %v2460 = vadd.f32 %v2444, 0.0081
    %v2461 = vadd.f32 %v2445, 0.0081
    %v2462 = vadd.f32 %v2446, 0.0081
    %v2463 = vadd.f32 %v2447, 0.0081
    %v2464 = vadd.f32 %v2448, 0.0081
    %v2465 = vmul.f32 %v2353, 18.0
    %v2466 = vmul.f32 %v2354, 18.0
    %v2467 = vmul.f32 %v2355, 18.0
    %v2468 = vmul.f32 %v2356, 18.0
    %v2469 = vmul.f32 %v2357, 18.0
    %v2470 = vmul.f32 %v2358, 18.0
    %v2471 = vmul.f32 %v2359, 18.0
    %v2472 = vmul.f32 %v2360, 18.0
    %v2473 = vmul.f32 %v2361, 18.0
    %v2474 = vmul.f32 %v2362, 18.0
    %v2475 = vmul.f32 %v2363, 18.0
    %v2476 = vmul.f32 %v2364, 18.0
    %v2477 = vmul.f32 %v2365, 18.0
    %v2478 = vmul.f32 %v2366, 18.0
    %v2479 = vmul.f32 %v2367, 18.0
    %v2480 = vmul.f32 %v2368, 18.0
    %v2481 = vsub.f32 %v2465, %v2433
    %v2482 = vsub.f32 %v2466, %v2434
    %v2483 = vsub.f32 %v2467, %v2435
    %v2484 = vsub.f32 %v2468, %v2436
    %v2485 = vsub.f32 %v2469, %v2437
    %v2486 = vsub.f32 %v2470, %v2438
    %v2487 = vsub.f32 %v2471, %v2439
    %v2488 = vsub.f32 %v2472, %v2440
    %v2489 = vsub.f32 %v2473, %v2441
    %v2490 = vsub.f32 %v2474, %v2442
    %v2491 = vsub.f32 %v2475, %v2443
    %v2492 = vsub.f32 %v2476, %v2444
    %v2493 = vsub.f32 %v2477, %v2445
    %v2494 = vsub.f32 %v2478, %v2446
    %v2495 = vsub.f32 %v2479, %v2447
    %v2496 = vsub.f32 %v2480, %v2448
    %v2497 = vadd.f32 %v2481, 0.0729
    %v2498 = vadd.f32 %v2482, 0.0729
    %v2499 = vadd.f32 %v2483, 0.0729
    %v2500 = vadd.f32 %v2484, 0.0729
    %v2501 = vadd.f32 %v2485, 0.0729
    %v2502 = vadd.f32 %v2486, 0.0729
    %v2503 = vadd.f32 %v2487, 0.0729
    %v2504 = vadd.f32 %v2488, 0.0729
    %v2505 = vadd.f32 %v2489, 0.0729
    %v2506 = vadd.f32 %v2490, 0.0729
    %v2507 = vadd.f32 %v2491, 0.0729
    %v2508 = vadd.f32 %v2492, 0.0729
    %v2509 = vadd.f32 %v2493, 0.0729
    %v2510 = vadd.f32 %v2494, 0.0729
    %v2511 = vadd.f32 %v2495, 0.0729
    %v2512 = vadd.f32 %v2496, 0.0729
    %v2513 = vmul.f32 %v2449, %v2497
    %v2514 = vmul.f32 %v2450, %v2498
    %v2515 = vmul.f32 %v2451, %v2499
    %v2516 = vmul.f32 %v2452, %v2500
    %v2517 = vmul.f32 %v2453, %v2501
    %v2518 = vmul.f32 %v2454, %v2502
    %v2519 = vmul.f32 %v2455, %v2503
    %v2520 = vmul.f32 %v2456, %v2504
    %v2521 = vmul.f32 %v2457, %v2505
    %v2522 = vmul.f32 %v2458, %v2506
    %v2523 = vmul.f32 %v2459, %v2507
    %v2524 = vmul.f32 %v2460, %v2508
    %v2525 = vmul.f32 %v2461, %v2509
    %v2526 = vmul.f32 %v2462, %v2510
    %v2527 = vmul.f32 %v2463, %v2511
    %v2528 = vmul.f32 %v2464, %v2512
    %v2529 = vadd.f32 %v2417, 0.0081
    %v2530 = vadd.f32 %v2418, 0.0081
    %v2531 = vadd.f32 %v2419, 0.0081
    %v2532 = vadd.f32 %v2420, 0.0081
    %v2533 = vadd.f32 %v2421, 0.0081
    %v2534 = vadd.f32 %v2422, 0.0081
    %v2535 = vadd.f32 %v2423, 0.0081
    %v2536 = vadd.f32 %v2424, 0.0081
    %v2537 = vadd.f32 %v2425, 0.0081
    %v2538 = vadd.f32 %v2426, 0.0081
    %v2539 = vadd.f32 %v2427, 0.0081
    %v2540 = vadd.f32 %v2428, 0.0081
    %v2541 = vadd.f32 %v2429, 0.0081
    %v2542 = vadd.f32 %v2430, 0.0081
    %v2543 = vadd.f32 %v2431, 0.0081
    %v2544 = vadd.f32 %v2432, 0.0081
    %v2545 = vadd.f32 %v1905, %v2129
    %v2546 = vadd.f32 %v1906, %v2130
    %v2547 = vadd.f32 %v1907, %v2131
    %v2548 = vadd.f32 %v1908, %v2132
    %v2549 = vadd.f32 %v1909, %v2133
    %v2550 = vadd.f32 %v1910, %v2134
    %v2551 = vadd.f32 %v1911, %v2135
    %v2552 = vadd.f32 %v1912, %v2136
    %v2553 = vadd.f32 %v1913, %v2137
    %v2554 = vadd.f32 %v1914, %v2138
    %v2555 = vadd.f32 %v1915, %v2139
    %v2556 = vadd.f32 %v1916, %v2140
    %v2557 = vadd.f32 %v1917, %v2141
    %v2558 = vadd.f32 %v1918, %v2142
    %v2559 = vadd.f32 %v1919, %v2143
    %v2560 = vadd.f32 %v1920, %v2144
    %v2561 = vmul.f32 %v2545, 9.0
    %v2562 = vmul.f32 %v2546, 9.0
    %v2563 = vmul.f32 %v2547, 9.0
    %v2564 = vmul.f32 %v2548, 9.0
    %v2565 = vmul.f32 %v2549, 9.0
    %v2566 = vmul.f32 %v2550, 9.0
    %v2567 = vmul.f32 %v2551, 9.0
    %v2568 = vmul.f32 %v2552, 9.0
    %v2569 = vmul.f32 %v2553, 9.0
    %v2570 = vmul.f32 %v2554, 9.0
    %v2571 = vmul.f32 %v2555, 9.0
    %v2572 = vmul.f32 %v2556, 9.0
    %v2573 = vmul.f32 %v2557, 9.0
    %v2574 = vmul.f32 %v2558, 9.0
    %v2575 = vmul.f32 %v2559, 9.0
    %v2576 = vmul.f32 %v2560, 9.0
    %v2577 = vsub.f32 %v2561, %v2417
    %v2578 = vsub.f32 %v2562, %v2418
    %v2579 = vsub.f32 %v2563, %v2419
    %v2580 = vsub.f32 %v2564, %v2420
    %v2581 = vsub.f32 %v2565, %v2421
    %v2582 = vsub.f32 %v2566, %v2422
    %v2583 = vsub.f32 %v2567, %v2423
    %v2584 = vsub.f32 %v2568, %v2424
    %v2585 = vsub.f32 %v2569, %v2425
    %v2586 = vsub.f32 %v2570, %v2426
    %v2587 = vsub.f32 %v2571, %v2427
    %v2588 = vsub.f32 %v2572, %v2428
    %v2589 = vsub.f32 %v2573, %v2429
    %v2590 = vsub.f32 %v2574, %v2430
    %v2591 = vsub.f32 %v2575, %v2431
    %v2592 = vsub.f32 %v2576, %v2432
    %v2593 = vadd.f32 %v2577, 0.0729
    %v2594 = vadd.f32 %v2578, 0.0729
    %v2595 = vadd.f32 %v2579, 0.0729
    %v2596 = vadd.f32 %v2580, 0.0729
    %v2597 = vadd.f32 %v2581, 0.0729
    %v2598 = vadd.f32 %v2582, 0.0729
    %v2599 = vadd.f32 %v2583, 0.0729
    %v2600 = vadd.f32 %v2584, 0.0729
    %v2601 = vadd.f32 %v2585, 0.0729
    %v2602 = vadd.f32 %v2586, 0.0729
    %v2603 = vadd.f32 %v2587, 0.0729
    %v2604 = vadd.f32 %v2588, 0.0729
    %v2605 = vadd.f32 %v2589, 0.0729
    %v2606 = vadd.f32 %v2590, 0.0729
    %v2607 = vadd.f32 %v2591, 0.0729
    %v2608 = vadd.f32 %v2592, 0.0729
    %v2609 = vmul.f32 %v2529, %v2593
    %v2610 = vmul.f32 %v2530, %v2594
    %v2611 = vmul.f32 %v2531, %v2595
    %v2612 = vmul.f32 %v2532, %v2596
    %v2613 = vmul.f32 %v2533, %v2597
    %v2614 = vmul.f32 %v2534, %v2598
    %v2615 = vmul.f32 %v2535, %v2599
    %v2616 = vmul.f32 %v2536, %v2600
    %v2617 = vmul.f32 %v2537, %v2601
    %v2618 = vmul.f32 %v2538, %v2602
    %v2619 = vmul.f32 %v2539, %v2603
    %v2620 = vmul.f32 %v2540, %v2604
    %v2621 = vmul.f32 %v2541, %v2605
    %v2622 = vmul.f32 %v2542, %v2606
    %v2623 = vmul.f32 %v2543, %v2607
    %v2624 = vmul.f32 %v2544, %v2608
    %v2625 = vrcp.pop %v2609
    %v2626 = vrcp.pop %v2610
    %v2627 = vrcp.pop %v2611
    %v2628 = vrcp.pop %v2612
    %v2629 = vrcp.pop %v2613
    %v2630 = vrcp.pop %v2614
    %v2631 = vrcp.pop %v2615
    %v2632 = vrcp.pop %v2616
    %v2633 = vrcp.pop %v2617
    %v2634 = vrcp.pop %v2618
    %v2635 = vrcp.pop %v2619
    %v2636 = vrcp.pop %v2620
    %v2637 = vrcp.pop %v2621
    %v2638 = vrcp.pop %v2622
    %v2639 = vrcp.pop %v2623
    %v2640 = vrcp.pop %v2624
    %v2641 = vmul.f32 %v2609, %v2625
    %v2642 = vmul.f32 %v2610, %v2626
    %v2643 = vmul.f32 %v2611, %v2627
    %v2644 = vmul.f32 %v2612, %v2628
    %v2645 = vmul.f32 %v2613, %v2629
    %v2646 = vmul.f32 %v2614, %v2630
    %v2647 = vmul.f32 %v2615, %v2631
    %v2648 = vmul.f32 %v2616, %v2632
    %v2649 = vmul.f32 %v2617, %v2633
    %v2650 = vmul.f32 %v2618, %v2634
    %v2651 = vmul.f32 %v2619, %v2635
    %v2652 = vmul.f32 %v2620, %v2636
    %v2653 = vmul.f32 %v2621, %v2637
    %v2654 = vmul.f32 %v2622, %v2638
    %v2655 = vmul.f32 %v2623, %v2639
    %v2656 = vmul.f32 %v2624, %v2640
    %v2657 = vsub.f32 2.0, %v2641
    %v2658 = vsub.f32 2.0, %v2642
    %v2659 = vsub.f32 2.0, %v2643
    %v2660 = vsub.f32 2.0, %v2644
    %v2661 = vsub.f32 2.0, %v2645
    %v2662 = vsub.f32 2.0, %v2646
    %v2663 = vsub.f32 2.0, %v2647
    %v2664 = vsub.f32 2.0, %v2648
    %v2665 = vsub.f32 2.0, %v2649
    %v2666 = vsub.f32 2.0, %v2650
    %v2667 = vsub.f32 2.0, %v2651
    %v2668 = vsub.f32 2.0, %v2652
    %v2669 = vsub.f32 2.0, %v2653
    %v2670 = vsub.f32 2.0, %v2654
    %v2671 = vsub.f32 2.0, %v2655
    %v2672 = vsub.f32 2.0, %v2656
    %v2673 = vmul.f32 %v2625, %v2657
    %v2674 = vmul.f32 %v2626, %v2658
    %v2675 = vmul.f32 %v2627, %v2659
    %v2676 = vmul.f32 %v2628, %v2660
    %v2677 = vmul.f32 %v2629, %v2661
    %v2678 = vmul.f32 %v2630, %v2662
    %v2679 = vmul.f32 %v2631, %v2663
    %v2680 = vmul.f32 %v2632, %v2664
    %v2681 = vmul.f32 %v2633, %v2665
    %v2682 = vmul.f32 %v2634, %v2666
    %v2683 = vmul.f32 %v2635, %v2667
    %v2684 = vmul.f32 %v2636, %v2668
    %v2685 = vmul.f32 %v2637, %v2669
    %v2686 = vmul.f32 %v2638, %v2670
    %v2687 = vmul.f32 %v2639, %v2671
    %v2688 = vmul.f32 %v2640, %v2672
    %v2689 = vmul.f32 %v2513, %v2673
    %v2690 = vmul.f32 %v2514, %v2674
    %v2691 = vmul.f32 %v2515, %v2675
    %v2692 = vmul.f32 %v2516, %v2676
    %v2693 = vmul.f32 %v2517, %v2677
    %v2694 = vmul.f32 %v2518, %v2678
    %v2695 = vmul.f32 %v2519, %v2679
    %v2696 = vmul.f32 %v2520, %v2680
    %v2697 = vmul.f32 %v2521, %v2681
    %v2698 = vmul.f32 %v2522, %v2682
    %v2699 = vmul.f32 %v2523, %v2683
    %v2700 = vmul.f32 %v2524, %v2684
    %v2701 = vmul.f32 %v2525, %v2685
    %v2702 = vmul.f32 %v2526, %v2686
    %v2703 = vmul.f32 %v2527, %v2687
    %v2704 = vmul.f32 %v2528, %v2688
    %v2705 = vsub.f32 1.0, %v2689
    %v2706 = vsub.f32 1.0, %v2690
    %v2707 = vsub.f32 1.0, %v2691
    %v2708 = vsub.f32 1.0, %v2692
    %v2709 = vsub.f32 1.0, %v2693
    %v2710 = vsub.f32 1.0, %v2694
    %v2711 = vsub.f32 1.0, %v2695
    %v2712 = vsub.f32 1.0, %v2696
    %v2713 = vsub.f32 1.0, %v2697
    %v2714 = vsub.f32 1.0, %v2698
    %v2715 = vsub.f32 1.0, %v2699
    %v2716 = vsub.f32 1.0, %v2700
    %v2717 = vsub.f32 1.0, %v2701
    %v2718 = vsub.f32 1.0, %v2702
    %v2719 = vsub.f32 1.0, %v2703
    %v2720 = vsub.f32 1.0, %v2704
    %v2721 = vmul.f32 %v2705, 0.5
    %v2722 = vmul.f32 %v2706, 0.5
    %v2723 = vmul.f32 %v2707, 0.5
    %v2724 = vmul.f32 %v2708, 0.5
    %v2725 = vmul.f32 %v2709, 0.5
    %v2726 = vmul.f32 %v2710, 0.5
    %v2727 = vmul.f32 %v2711, 0.5
    %v2728 = vmul.f32 %v2712, 0.5
    %v2729 = vmul.f32 %v2713, 0.5
    %v2730 = vmul.f32 %v2714, 0.5
    %v2731 = vmul.f32 %v2715, 0.5
    %v2732 = vmul.f32 %v2716, 0.5
    %v2733 = vmul.f32 %v2717, 0.5
    %v2734 = vmul.f32 %v2718, 0.5
    %v2735 = vmul.f32 %v2719, 0.5
    %v2736 = vmul.f32 %v2720, 0.5
    %v2737 = vmax.f32 %v2721, 0.0
    %v2738 = vmax.f32 %v2722, 0.0
    %v2739 = vmax.f32 %v2723, 0.0
    %v2740 = vmax.f32 %v2724, 0.0
    %v2741 = vmax.f32 %v2725, 0.0
    %v2742 = vmax.f32 %v2726, 0.0
    %v2743 = vmax.f32 %v2727, 0.0
    %v2744 = vmax.f32 %v2728, 0.0
    %v2745 = vmax.f32 %v2729, 0.0
    %v2746 = vmax.f32 %v2730, 0.0
    %v2747 = vmax.f32 %v2731, 0.0
    %v2748 = vmax.f32 %v2732, 0.0
    %v2749 = vmax.f32 %v2733, 0.0
    %v2750 = vmax.f32 %v2734, 0.0
    %v2751 = vmax.f32 %v2735, 0.0
    %v2752 = vmax.f32 %v2736, 0.0
    %v2753 = vmin.f32 %v2737, 1.0
    %v2754 = vmin.f32 %v2738, 1.0
    %v2755 = vmin.f32 %v2739, 1.0
    %v2756 = vmin.f32 %v2740, 1.0
    %v2757 = vmin.f32 %v2741, 1.0
    %v2758 = vmin.f32 %v2742, 1.0
    %v2759 = vmin.f32 %v2743, 1.0
    %v2760 = vmin.f32 %v2744, 1.0
    %v2761 = vmin.f32 %v2745, 1.0
    %v2762 = vmin.f32 %v2746, 1.0
    %v2763 = vmin.f32 %v2747, 1.0
    %v2764 = vmin.f32 %v2748, 1.0
    %v2765 = vmin.f32 %v2749, 1.0
    %v2766 = vmin.f32 %v2750, 1.0
    %v2767 = vmin.f32 %v2751, 1.0
    %v2768 = vmin.f32 %v2752, 1.0
    %vm2769 = vcmask 130048
    %2770 = vst.msk [vmem:[#allocation12] sm:$0xff] %vm2769, %v2753
    %2771 = vst.msk [vmem:[#allocation12 + $0x8] sm:$0xff] %vm2769, %v2754
    %2772 = vst.msk [vmem:[#allocation12 + $0x10] sm:$0xff] %vm2769, %v2755
    %2773 = vst.msk [vmem:[#allocation12 + $0x18] sm:$0xff] %vm2769, %v2756
    %2774 = vst.msk [vmem:[#allocation12 + $0x20] sm:$0xff] %vm2769, %v2757
    %2775 = vst.msk [vmem:[#allocation12 + $0x28] sm:$0xff] %vm2769, %v2758
    %2776 = vst.msk [vmem:[#allocation12 + $0x30] sm:$0xff] %vm2769, %v2759
    %2777 = vst.msk [vmem:[#allocation12 + $0x38] sm:$0xff] %vm2769, %v2760
    %2778 = vst.msk [vmem:[#allocation12 + $0x40] sm:$0xff] %vm2769, %v2761
    %2779 = vst.msk [vmem:[#allocation12 + $0x48] sm:$0xff] %vm2769, %v2762
    %2780 = vst.msk [vmem:[#allocation12 + $0x50] sm:$0xff] %vm2769, %v2763
    %2781 = vst.msk [vmem:[#allocation12 + $0x58] sm:$0xff] %vm2769, %v2764
    %2782 = vst.msk [vmem:[#allocation12 + $0x60] sm:$0xff] %vm2769, %v2765
    %2783 = vst.msk [vmem:[#allocation12 + $0x68] sm:$0xff] %vm2769, %v2766
    %2784 = vst.msk [vmem:[#allocation12 + $0x70] sm:$0xff] %vm2769, %v2767
    %2785 = vst.msk [vmem:[#allocation12 + $0x78] sm:$0xff] %vm2769, %v2768
    // Predicated region
    $region18: #{tpu_custom_call.1} parent=1 // pred_check
      _
    $region19: #{tpu_custom_call.1} parent=1 // pred_check_branch
      %2787 = sbr.rel (0) target = $region21
    $region20: #{tpu_custom_call.1} parent=1 // pred_region
      %2789 = vsyncadd [#allocation9], 0
      %s2790 = sshll.u32 [#allocation12], 4
      %s2791 = int_to_ptr.vmem [resolvable:$true] %s2790
      %s2792 = sshll.u32 %s2, 4
      %s2793 = int_to_ptr.hbm [resolvable:$true] %s2792
      %2798 = dma.vmem_to_hbm [thread:$0]  %s2791, 2048, %s2793, [#allocation9], 128, 128, 8
    $region21: #{tpu_custom_call.1} parent=1 // pred_fallthru
      _
    // Predicated region
    $region22: #{tpu_custom_call.1} parent=1 // pred_check
      _
    $region23: #{tpu_custom_call.1} parent=1 // pred_check_branch
      %2800 = sbr.rel (0) target = $region25
    $region24: #{tpu_custom_call.1} parent=1 // pred_region
      %2802 = dma.done [#allocation9], 2048
    $region25: #{tpu_custom_call.1} parent=1 // pred_fallthru
      _
    %2803 = vsyncpa [#allocation8], 1
    %2804 = vsyncpa [#allocation11], 1
    %2805 = vsyncpa [#allocation9], 1

</llo_original>
